<compile_context>
chip_gen: v7x
topology: tpu7x:2x2x1
jax: 0.10.0
libtpu: 0.0.40
codegen_flags: <defaults>
</compile_context>

<pallas_src>
import functools

import jax
import jax.numpy as jnp
from jax.experimental import pallas as pl
from jax.experimental.pallas import tpu as pltpu

# Layer sizes taken directly from the PyTorch module __init__.
ENC_DIMS = [28 * 28, 128, 64, 16, 3]
DEC_DIMS = [3, 16, 64, 128, 28 * 28]


def _round_up(n, m):
    return ((n + m - 1) // m) * m


def _autoencoder_kernel(x_ref, *refs):
    """refs = 16 param refs (w1,b1,...,w8,b8) followed by (enc_ref, dec_ref)."""
    param_refs = refs[:16]
    enc_ref, dec_ref = refs[16], refs[17]

    # h starts in the I/O dtype; each layer casts it to the weight's dtype for
    # the MXU (bf16 for the two big boundary layers, f32 elsewhere) and
    # accumulates in f32.
    h = x_ref[...]

    # ---- encoder: (Linear + Tanh) x3, then Linear ----
    for layer in range(4):
        w = param_refs[2 * layer][...]
        b = param_refs[2 * layer + 1][...].astype(jnp.float32)   # (1, out)
        h = jnp.dot(h.astype(w.dtype), w, preferred_element_type=jnp.float32) + b
        if layer < 3:
            h = jnp.tanh(h)
    enc_ref[...] = h.astype(enc_ref.dtype)

    # ---- decoder: (Linear + Tanh) x3, then Linear + Sigmoid ----
    for layer in range(4):
        w = param_refs[8 + 2 * layer][...]
        b = param_refs[8 + 2 * layer + 1][...].astype(jnp.float32)
        h = jnp.dot(h.astype(w.dtype), w, preferred_element_type=jnp.float32) + b
        if layer < 3:
            h = jnp.tanh(h)
        else:
            # sigmoid(x) == 0.5 * (tanh(0.5 * x) + 1): single EUP op + VPU fma.
            h = 0.5 * (jnp.tanh(0.5 * h) + 1.0)
    dec_ref[...] = h.astype(dec_ref.dtype)


@functools.partial(jax.jit, static_argnames=("block_b",))
def autoencoder_forward(x, params, block_b=512):
    """x: [B, 784] (f32 or bf16 -- bf16 preferred for inference, it halves the
    dominant HBM streams).  params: flat [w1,b1,...,w8,b8], w (in,out), b (1,out).
    Returns (encoded [B,3], decoded [B,784]) in x.dtype."""
    B, D_in = x.shape
    assert D_in == ENC_DIMS[0]
    assert block_b % 8 == 0

    out_dtype = x.dtype

    # Kernel-side params: f32, except the two big boundary weights which feed
    # the MXU in bf16 (f32 accumulation keeps the numerics close to f32).
    kparams = [p.astype(jnp.float32) for p in params]
    kparams[0] = params[0].astype(jnp.bfloat16)    # encoder w1: 784 x 128
    kparams[14] = params[14].astype(jnp.bfloat16)  # decoder w8: 128 x 784

    # Adaptive batch tile: big tiles for throughput, shrink for small inputs.
    # Ragged edge is handled by Pallas (masked edge-block stores); rows are
    # independent so undefined data in the padded read region is harmless.
    bb = min(block_b, _round_up(B, 8))
    grid = (pl.cdiv(B, bb),)

    x_spec = pl.BlockSpec((bb, D_in), lambda i: (i, 0))
    # Params are small and map to block (0, 0) every step -> fetched once,
    # VMEM-resident across the whole grid.
    param_specs = [pl.BlockSpec(p.shape, lambda i: (0, 0)) for p in kparams]
    enc_spec = pl.BlockSpec((bb, ENC_DIMS[-1]), lambda i: (i, 0))
    dec_spec = pl.BlockSpec((bb, DEC_DIMS[-1]), lambda i: (i, 0))

    # Advisory cost estimate for XLA's scheduler.
    flops_per_row = 2 * (
        sum(a * b for a, b in zip(ENC_DIMS[:-1], ENC_DIMS[1:]))
        + sum(a * b for a, b in zip(DEC_DIMS[:-1], DEC_DIMS[1:]))
    )
    transc_per_row = sum(ENC_DIMS[1:-1]) + sum(DEC_DIMS[1:-1]) + DEC_DIMS[-1]
    param_bytes = sum(int(p.size) * p.dtype.itemsize for p in kparams)
    itemsize = jnp.dtype(out_dtype).itemsize
    cost = pl.CostEstimate(
        flops=flops_per_row * B,
        transcendentals=transc_per_row * B,
        bytes_accessed=B * (D_in + ENC_DIMS[-1] + DEC_DIMS[-1]) * itemsize + param_bytes,
    )

    enc, dec = pl.pallas_call(
        _autoencoder_kernel,
        out_shape=(
            jax.ShapeDtypeStruct((B, ENC_DIMS[-1]), out_dtype),
            jax.ShapeDtypeStruct((B, DEC_DIMS[-1]), out_dtype),
        ),
        grid_spec=pltpu.PrefetchScalarGridSpec(
            num_scalar_prefetch=0,
            grid=grid,
            in_specs=[x_spec] + param_specs,
            out_specs=[enc_spec, dec_spec],
        ),
        compiler_params=pltpu.CompilerParams(
            dimension_semantics=("parallel",),       # megacore sharding on v7x
            vmem_limit_bytes=48 * 1024 * 1024,       # headroom even on v7x (64 MiB/TC)
        ),
        cost_estimate=cost,
    )(x, *kparams)

    return enc, dec


def init_params(key):
    """PyTorch-style uniform(-1/sqrt(fan_in), 1/sqrt(fan_in)) init.

    Returns flat list [w1, b1, ..., w8, b8]; w stored as (in, out), b as (1, out).
    """
    dims = list(zip(ENC_DIMS[:-1], ENC_DIMS[1:])) + list(zip(DEC_DIMS[:-1], DEC_DIMS[1:]))
    params = []
    for (fan_in, fan_out) in dims:
        key, kw, kb = jax.random.split(key, 3)
        bound = 1.0 / jnp.sqrt(jnp.float32(fan_in))
        w = jax.random.uniform(kw, (fan_in, fan_out), jnp.float32, -bound, bound)
        b = jax.random.uniform(kb, (1, fan_out), jnp.float32, -bound, bound)
        params += [w, b]
    return params


def reference_forward(x, params):
    """Pure-JAX f32 reference with identical semantics to the PyTorch module."""
    h = x.astype(jnp.float32)
    for layer in range(4):
        h = h @ params[2 * layer] + params[2 * layer + 1]
        if layer < 3:
            h = jnp.tanh(h)
    enc = h
    for layer in range(4):
        h = h @ params[8 + 2 * layer] + params[8 + 2 * layer + 1]
        if layer < 3:
            h = jnp.tanh(h)
        else:
            h = jax.nn.sigmoid(h)
    return enc, h


if __name__ == "__main__":
    key = jax.random.PRNGKey(0)
    key, kx = jax.random.split(key)
    params = init_params(jax.random.PRNGKey(0))

    # --- f32 I/O check (bf16 MXU operands on the two big layers -> relaxed tol) ---
    B = 16
    x = jax.random.normal(kx, (B, 28 * 28), dtype=jnp.float32)
    enc, dec = autoencoder_forward(x, params)
    jax.block_until_ready((enc, dec))
    enc_ref, dec_ref = reference_forward(x, params)
    assert enc.shape == (B, 3) and dec.shape == (B, 784)
    assert jnp.allclose(enc, enc_ref, atol=2e-2, rtol=2e-2)
    assert jnp.allclose(dec, dec_ref, atol=2e-2, rtol=2e-2)

    # --- bf16 HBM-I/O check (loose tolerance), also exercises the ragged edge
    # block (B=12 not a multiple of the 8-aligned tile) with no jnp.pad. ---
    B2 = 12
    key, kx2 = jax.random.split(key)
    xb = jax.random.normal(kx2, (B2, 28 * 28), dtype=jnp.float32).astype(jnp.bfloat16)
    enc_b, dec_b = autoencoder_forward(xb, params)
    jax.block_until_ready((enc_b, dec_b))
    enc_rb, dec_rb = reference_forward(xb.astype(jnp.float32), params)
    assert enc_b.shape == (B2, 3) and dec_b.shape == (B2, 784)
    assert jnp.allclose(enc_b.astype(jnp.float32), enc_rb, atol=4e-2, rtol=4e-2)
    assert jnp.allclose(dec_b.astype(jnp.float32), dec_rb, atol=4e-2, rtol=4e-2)

    print("KERNEL_OK")
</pallas_src>

<mosaic_0001>
module attributes {stable_mosaic.version = 11 : i64} {
  func.func @_autoencoder_kernel(%arg0: i32, %arg1: memref<16x784xf32, #tpu.memory_space<vmem>>, %arg2: memref<784x128xbf16, #tpu.memory_space<vmem>>, %arg3: memref<1x128xf32, #tpu.memory_space<vmem>>, %arg4: memref<128x64xf32, #tpu.memory_space<vmem>>, %arg5: memref<1x64xf32, #tpu.memory_space<vmem>>, %arg6: memref<64x16xf32, #tpu.memory_space<vmem>>, %arg7: memref<1x16xf32, #tpu.memory_space<vmem>>, %arg8: memref<16x3xf32, #tpu.memory_space<vmem>>, %arg9: memref<1x3xf32, #tpu.memory_space<vmem>>, %arg10: memref<3x16xf32, #tpu.memory_space<vmem>>, %arg11: memref<1x16xf32, #tpu.memory_space<vmem>>, %arg12: memref<16x64xf32, #tpu.memory_space<vmem>>, %arg13: memref<1x64xf32, #tpu.memory_space<vmem>>, %arg14: memref<64x128xf32, #tpu.memory_space<vmem>>, %arg15: memref<1x128xf32, #tpu.memory_space<vmem>>, %arg16: memref<128x784xbf16, #tpu.memory_space<vmem>>, %arg17: memref<1x784xf32, #tpu.memory_space<vmem>>, %arg18: memref<16x3xf32, #tpu.memory_space<vmem>>, %arg19: memref<16x784xf32, #tpu.memory_space<vmem>>) attributes {dimension_semantics = [#tpu.dimension_semantics<parallel>], iteration_bounds = array<i64: 1>, scalar_prefetch = 0 : i64, scratch_operands = 0 : i64, tpu.core_type = #tpu.core_type<tc>, window_params = [{transform_indices = @transform_0, window_bounds = array<i64: 16, 784>}, {pipeline_mode = #tpu.pipeline_mode<synchronous>, transform_indices = @transform_1, window_bounds = array<i64: 784, 128>}, {pipeline_mode = #tpu.pipeline_mode<synchronous>, transform_indices = @transform_2, window_bounds = array<i64: 1, 128>}, {pipeline_mode = #tpu.pipeline_mode<synchronous>, transform_indices = @transform_3, window_bounds = array<i64: 128, 64>}, {pipeline_mode = #tpu.pipeline_mode<synchronous>, transform_indices = @transform_4, window_bounds = array<i64: 1, 64>}, {pipeline_mode = #tpu.pipeline_mode<synchronous>, transform_indices = @transform_5, window_bounds = array<i64: 64, 16>}, {pipeline_mode = #tpu.pipeline_mode<synchronous>, transform_indices = @transform_6, window_bounds = array<i64: 1, 16>}, {pipeline_mode = #tpu.pipeline_mode<synchronous>, transform_indices = @transform_7, window_bounds = array<i64: 16, 3>}, {pipeline_mode = #tpu.pipeline_mode<synchronous>, transform_indices = @transform_8, window_bounds = array<i64: 1, 3>}, {pipeline_mode = #tpu.pipeline_mode<synchronous>, transform_indices = @transform_9, window_bounds = array<i64: 3, 16>}, {pipeline_mode = #tpu.pipeline_mode<synchronous>, transform_indices = @transform_10, window_bounds = array<i64: 1, 16>}, {pipeline_mode = #tpu.pipeline_mode<synchronous>, transform_indices = @transform_11, window_bounds = array<i64: 16, 64>}, {pipeline_mode = #tpu.pipeline_mode<synchronous>, transform_indices = @transform_12, window_bounds = array<i64: 1, 64>}, {pipeline_mode = #tpu.pipeline_mode<synchronous>, transform_indices = @transform_13, window_bounds = array<i64: 64, 128>}, {pipeline_mode = #tpu.pipeline_mode<synchronous>, transform_indices = @transform_14, window_bounds = array<i64: 1, 128>}, {pipeline_mode = #tpu.pipeline_mode<synchronous>, transform_indices = @transform_15, window_bounds = array<i64: 128, 784>}, {pipeline_mode = #tpu.pipeline_mode<synchronous>, transform_indices = @transform_16, window_bounds = array<i64: 1, 784>}, {transform_indices = @transform_17, window_bounds = array<i64: 16, 3>}, {transform_indices = @transform_18, window_bounds = array<i64: 16, 784>}]} {
    %c0 = arith.constant 0 : index
    %c0_0 = arith.constant 0 : index
    %0 = vector.load %arg1[%c0, %c0_0] : memref<16x784xf32, #tpu.memory_space<vmem>>, vector<16x784xf32>
    %c0_1 = arith.constant 0 : index
    %c0_2 = arith.constant 0 : index
    %1 = vector.load %arg2[%c0_1, %c0_2] : memref<784x128xbf16, #tpu.memory_space<vmem>>, vector<784x128xbf16>
    %c0_3 = arith.constant 0 : index
    %c0_4 = arith.constant 0 : index
    %2 = vector.load %arg3[%c0_3, %c0_4] : memref<1x128xf32, #tpu.memory_space<vmem>>, vector<1x128xf32>
    %3 = arith.truncf %0 : vector<16x784xf32> to vector<16x784xbf16>
    %cst = arith.constant dense<0.000000e+00> : vector<16x128xf32>
    %4 = tpu.matmul %3, %1, %cst {dimension_numbers = #tpu.dot_dimension_numbers<[1], [0], [0], [1], [0, 0, 1, 1], [], []>} : vector<16x784xbf16>, vector<784x128xbf16>, vector<16x128xf32> -> vector<16x128xf32>
    %5 = vector.broadcast %2 : vector<1x128xf32> to vector<16x128xf32>
    %6 = arith.addf %4, %5 : vector<16x128xf32>
    %7 = math.tanh %6 : vector<16x128xf32>
    %c0_5 = arith.constant 0 : index
    %c0_6 = arith.constant 0 : index
    %8 = vector.load %arg4[%c0_5, %c0_6] : memref<128x64xf32, #tpu.memory_space<vmem>>, vector<128x64xf32>
    %c0_7 = arith.constant 0 : index
    %c0_8 = arith.constant 0 : index
    %9 = vector.load %arg5[%c0_7, %c0_8] : memref<1x64xf32, #tpu.memory_space<vmem>>, vector<1x64xf32>
    %cst_9 = arith.constant dense<0.000000e+00> : vector<16x64xf32>
    %10 = tpu.matmul %7, %8, %cst_9 {dimension_numbers = #tpu.dot_dimension_numbers<[1], [0], [0], [1], [0, 0, 1, 1], [], []>} : vector<16x128xf32>, vector<128x64xf32>, vector<16x64xf32> -> vector<16x64xf32>
    %11 = vector.broadcast %9 : vector<1x64xf32> to vector<16x64xf32>
    %12 = arith.addf %10, %11 : vector<16x64xf32>
    %13 = math.tanh %12 : vector<16x64xf32>
    %c0_10 = arith.constant 0 : index
    %c0_11 = arith.constant 0 : index
    %14 = vector.load %arg6[%c0_10, %c0_11] : memref<64x16xf32, #tpu.memory_space<vmem>>, vector<64x16xf32>
    %c0_12 = arith.constant 0 : index
    %c0_13 = arith.constant 0 : index
    %15 = vector.load %arg7[%c0_12, %c0_13] : memref<1x16xf32, #tpu.memory_space<vmem>>, vector<1x16xf32>
    %cst_14 = arith.constant dense<0.000000e+00> : vector<16x16xf32>
    %16 = tpu.matmul %13, %14, %cst_14 {dimension_numbers = #tpu.dot_dimension_numbers<[1], [0], [0], [1], [0, 0, 1, 1], [], []>} : vector<16x64xf32>, vector<64x16xf32>, vector<16x16xf32> -> vector<16x16xf32>
    %17 = vector.broadcast %15 : vector<1x16xf32> to vector<16x16xf32>
    %18 = arith.addf %16, %17 : vector<16x16xf32>
    %19 = math.tanh %18 : vector<16x16xf32>
    %c0_15 = arith.constant 0 : index
    %c0_16 = arith.constant 0 : index
    %20 = vector.load %arg8[%c0_15, %c0_16] : memref<16x3xf32, #tpu.memory_space<vmem>>, vector<16x3xf32>
    %c0_17 = arith.constant 0 : index
    %c0_18 = arith.constant 0 : index
    %21 = vector.load %arg9[%c0_17, %c0_18] : memref<1x3xf32, #tpu.memory_space<vmem>>, vector<1x3xf32>
    %cst_19 = arith.constant dense<0.000000e+00> : vector<16x3xf32>
    %22 = tpu.matmul %19, %20, %cst_19 {dimension_numbers = #tpu.dot_dimension_numbers<[1], [0], [0], [1], [0, 0, 1, 1], [], []>} : vector<16x16xf32>, vector<16x3xf32>, vector<16x3xf32> -> vector<16x3xf32>
    %23 = vector.broadcast %21 : vector<1x3xf32> to vector<16x3xf32>
    %24 = arith.addf %22, %23 : vector<16x3xf32>
    %c0_20 = arith.constant 0 : index
    %c0_21 = arith.constant 0 : index
    %25 = vector.load %arg18[%c0_20, %c0_21] : memref<16x3xf32, #tpu.memory_space<vmem>>, vector<16x3xf32>
    tpu.vector_store %arg18[%c0_20, %c0_21], %24 {strides = array<i32>} : memref<16x3xf32, #tpu.memory_space<vmem>>, vector<16x3xf32>,
    %c0_22 = arith.constant 0 : index
    %c0_23 = arith.constant 0 : index
    %26 = vector.load %arg10[%c0_22, %c0_23] : memref<3x16xf32, #tpu.memory_space<vmem>>, vector<3x16xf32>
    %c0_24 = arith.constant 0 : index
    %c0_25 = arith.constant 0 : index
    %27 = vector.load %arg11[%c0_24, %c0_25] : memref<1x16xf32, #tpu.memory_space<vmem>>, vector<1x16xf32>
    %cst_26 = arith.constant dense<0.000000e+00> : vector<16x16xf32>
    %28 = tpu.matmul %24, %26, %cst_26 {dimension_numbers = #tpu.dot_dimension_numbers<[1], [0], [0], [1], [0, 0, 1, 1], [], []>} : vector<16x3xf32>, vector<3x16xf32>, vector<16x16xf32> -> vector<16x16xf32>
    %29 = vector.broadcast %27 : vector<1x16xf32> to vector<16x16xf32>
    %30 = arith.addf %28, %29 : vector<16x16xf32>
    %31 = math.tanh %30 : vector<16x16xf32>
    %c0_27 = arith.constant 0 : index
    %c0_28 = arith.constant 0 : index
    %32 = vector.load %arg12[%c0_27, %c0_28] : memref<16x64xf32, #tpu.memory_space<vmem>>, vector<16x64xf32>
    %c0_29 = arith.constant 0 : index
    %c0_30 = arith.constant 0 : index
    %33 = vector.load %arg13[%c0_29, %c0_30] : memref<1x64xf32, #tpu.memory_space<vmem>>, vector<1x64xf32>
    %cst_31 = arith.constant dense<0.000000e+00> : vector<16x64xf32>
    %34 = tpu.matmul %31, %32, %cst_31 {dimension_numbers = #tpu.dot_dimension_numbers<[1], [0], [0], [1], [0, 0, 1, 1], [], []>} : vector<16x16xf32>, vector<16x64xf32>, vector<16x64xf32> -> vector<16x64xf32>
    %35 = vector.broadcast %33 : vector<1x64xf32> to vector<16x64xf32>
    %36 = arith.addf %34, %35 : vector<16x64xf32>
    %37 = math.tanh %36 : vector<16x64xf32>
    %c0_32 = arith.constant 0 : index
    %c0_33 = arith.constant 0 : index
    %38 = vector.load %arg14[%c0_32, %c0_33] : memref<64x128xf32, #tpu.memory_space<vmem>>, vector<64x128xf32>
    %c0_34 = arith.constant 0 : index
    %c0_35 = arith.constant 0 : index
    %39 = vector.load %arg15[%c0_34, %c0_35] : memref<1x128xf32, #tpu.memory_space<vmem>>, vector<1x128xf32>
    %cst_36 = arith.constant dense<0.000000e+00> : vector<16x128xf32>
    %40 = tpu.matmul %37, %38, %cst_36 {dimension_numbers = #tpu.dot_dimension_numbers<[1], [0], [0], [1], [0, 0, 1, 1], [], []>} : vector<16x64xf32>, vector<64x128xf32>, vector<16x128xf32> -> vector<16x128xf32>
    %41 = vector.broadcast %39 : vector<1x128xf32> to vector<16x128xf32>
    %42 = arith.addf %40, %41 : vector<16x128xf32>
    %43 = math.tanh %42 : vector<16x128xf32>
    %c0_37 = arith.constant 0 : index
    %c0_38 = arith.constant 0 : index
    %44 = vector.load %arg16[%c0_37, %c0_38] : memref<128x784xbf16, #tpu.memory_space<vmem>>, vector<128x784xbf16>
    %c0_39 = arith.constant 0 : index
    %c0_40 = arith.constant 0 : index
    %45 = vector.load %arg17[%c0_39, %c0_40] : memref<1x784xf32, #tpu.memory_space<vmem>>, vector<1x784xf32>
    %46 = arith.truncf %43 : vector<16x128xf32> to vector<16x128xbf16>
    %cst_41 = arith.constant dense<0.000000e+00> : vector<16x784xf32>
    %47 = tpu.matmul %46, %44, %cst_41 {dimension_numbers = #tpu.dot_dimension_numbers<[1], [0], [0], [1], [0, 0, 1, 1], [], []>} : vector<16x128xbf16>, vector<128x784xbf16>, vector<16x784xf32> -> vector<16x784xf32>
    %48 = vector.broadcast %45 : vector<1x784xf32> to vector<16x784xf32>
    %49 = arith.addf %47, %48 : vector<16x784xf32>
    %cst_42 = arith.constant 5.000000e-01 : f32
    %50 = vector.broadcast %cst_42 : f32 to vector<16x784xf32>
    %51 = arith.mulf %50, %49 : vector<16x784xf32>
    %52 = math.tanh %51 : vector<16x784xf32>
    %cst_43 = arith.constant 1.000000e+00 : f32
    %53 = vector.broadcast %cst_43 : f32 to vector<16x784xf32>
    %54 = arith.addf %52, %53 : vector<16x784xf32>
    %cst_44 = arith.constant 5.000000e-01 : f32
    %55 = vector.broadcast %cst_44 : f32 to vector<16x784xf32>
    %56 = arith.mulf %55, %54 : vector<16x784xf32>
    %c0_45 = arith.constant 0 : index
    %c0_46 = arith.constant 0 : index
    %57 = vector.load %arg19[%c0_45, %c0_46] : memref<16x784xf32, #tpu.memory_space<vmem>>, vector<16x784xf32>
    tpu.vector_store %arg19[%c0_45, %c0_46], %56 {strides = array<i32>} : memref<16x784xf32, #tpu.memory_space<vmem>>, vector<16x784xf32>,
    return
  }
  func.func @transform_0(%arg0: i32) -> (i32, i32) {
    %c0_i32 = arith.constant 0 : i32
    %c0_i32_0 = arith.constant 0 : i32
    return %arg0, %c0_i32 : i32, i32
  }
  func.func @transform_1(%arg0: i32) -> (i32, i32) {
    %c0_i32 = arith.constant 0 : i32
    %c0_i32_0 = arith.constant 0 : i32
    %c0_i32_1 = arith.constant 0 : i32
    return %c0_i32, %c0_i32_0 : i32, i32
  }
  func.func @transform_2(%arg0: i32) -> (i32, i32) {
    %c0_i32 = arith.constant 0 : i32
    %c0_i32_0 = arith.constant 0 : i32
    %c0_i32_1 = arith.constant 0 : i32
    return %c0_i32, %c0_i32_0 : i32, i32
  }
  func.func @transform_3(%arg0: i32) -> (i32, i32) {
    %c0_i32 = arith.constant 0 : i32
    %c0_i32_0 = arith.constant 0 : i32
    %c0_i32_1 = arith.constant 0 : i32
    return %c0_i32, %c0_i32_0 : i32, i32
  }
  func.func @transform_4(%arg0: i32) -> (i32, i32) {
    %c0_i32 = arith.constant 0 : i32
    %c0_i32_0 = arith.constant 0 : i32
    %c0_i32_1 = arith.constant 0 : i32
    return %c0_i32, %c0_i32_0 : i32, i32
  }
  func.func @transform_5(%arg0: i32) -> (i32, i32) {
    %c0_i32 = arith.constant 0 : i32
    %c0_i32_0 = arith.constant 0 : i32
    %c0_i32_1 = arith.constant 0 : i32
    return %c0_i32, %c0_i32_0 : i32, i32
  }
  func.func @transform_6(%arg0: i32) -> (i32, i32) {
    %c0_i32 = arith.constant 0 : i32
    %c0_i32_0 = arith.constant 0 : i32
    %c0_i32_1 = arith.constant 0 : i32
    return %c0_i32, %c0_i32_0 : i32, i32
  }
  func.func @transform_7(%arg0: i32) -> (i32, i32) {
    %c0_i32 = arith.constant 0 : i32
    %c0_i32_0 = arith.constant 0 : i32
    %c0_i32_1 = arith.constant 0 : i32
    return %c0_i32, %c0_i32_0 : i32, i32
  }
  func.func @transform_8(%arg0: i32) -> (i32, i32) {
    %c0_i32 = arith.constant 0 : i32
    %c0_i32_0 = arith.constant 0 : i32
    %c0_i32_1 = arith.constant 0 : i32
    return %c0_i32, %c0_i32_0 : i32, i32
  }
  func.func @transform_9(%arg0: i32) -> (i32, i32) {
    %c0_i32 = arith.constant 0 : i32
    %c0_i32_0 = arith.constant 0 : i32
    %c0_i32_1 = arith.constant 0 : i32
    return %c0_i32, %c0_i32_0 : i32, i32
  }
  func.func @transform_10(%arg0: i32) -> (i32, i32) {
    %c0_i32 = arith.constant 0 : i32
    %c0_i32_0 = arith.constant 0 : i32
    %c0_i32_1 = arith.constant 0 : i32
    return %c0_i32, %c0_i32_0 : i32, i32
  }
  func.func @transform_11(%arg0: i32) -> (i32, i32) {
    %c0_i32 = arith.constant 0 : i32
    %c0_i32_0 = arith.constant 0 : i32
    %c0_i32_1 = arith.constant 0 : i32
    return %c0_i32, %c0_i32_0 : i32, i32
  }
  func.func @transform_12(%arg0: i32) -> (i32, i32) {
    %c0_i32 = arith.constant 0 : i32
    %c0_i32_0 = arith.constant 0 : i32
    %c0_i32_1 = arith.constant 0 : i32
    return %c0_i32, %c0_i32_0 : i32, i32
  }
  func.func @transform_13(%arg0: i32) -> (i32, i32) {
    %c0_i32 = arith.constant 0 : i32
    %c0_i32_0 = arith.constant 0 : i32
    %c0_i32_1 = arith.constant 0 : i32
    return %c0_i32, %c0_i32_0 : i32, i32
  }
  func.func @transform_14(%arg0: i32) -> (i32, i32) {
    %c0_i32 = arith.constant 0 : i32
    %c0_i32_0 = arith.constant 0 : i32
    %c0_i32_1 = arith.constant 0 : i32
    return %c0_i32, %c0_i32_0 : i32, i32
  }
  func.func @transform_15(%arg0: i32) -> (i32, i32) {
    %c0_i32 = arith.constant 0 : i32
    %c0_i32_0 = arith.constant 0 : i32
    %c0_i32_1 = arith.constant 0 : i32
    return %c0_i32, %c0_i32_0 : i32, i32
  }
  func.func @transform_16(%arg0: i32) -> (i32, i32) {
    %c0_i32 = arith.constant 0 : i32
    %c0_i32_0 = arith.constant 0 : i32
    %c0_i32_1 = arith.constant 0 : i32
    return %c0_i32, %c0_i32_0 : i32, i32
  }
  func.func @transform_17(%arg0: i32) -> (i32, i32) {
    %c0_i32 = arith.constant 0 : i32
    %c0_i32_0 = arith.constant 0 : i32
    return %arg0, %c0_i32 : i32, i32
  }
  func.func @transform_18(%arg0: i32) -> (i32, i32) {
    %c0_i32 = arith.constant 0 : i32
    %c0_i32_0 = arith.constant 0 : i32
    return %arg0, %c0_i32 : i32, i32
  }
}

</mosaic_0001>

<llo_original>
// kernel: autoencoder_forward.1
$region0: #{autoencoder_forward.1}
  #allocation0 [shape = 'u32[]', space=smem, size = 0x4, offset = 0x4, fixed_abs, tag = 'smem constant byte address 0x4 - core index']
  #allocation1 [shape = 'u32[144,128]{1,0:T(1,128)}', space=vmem, size = 0x12000, scoped, tag = 'internal scratch']
  %s0 = inlined_call_operand.vmem [shape: f32[16,784], index: 0, kind: input, shape index: {}]
  %s1 = inlined_call_operand.vmem [shape: bf16[784,128], index: 1, kind: input, shape index: {}]
  %s2 = inlined_call_operand.vmem [shape: f32[1,128], index: 2, kind: input, shape index: {}]
  %s3 = inlined_call_operand.vmem [shape: f32[128,64], index: 3, kind: input, shape index: {}]
  %s4 = inlined_call_operand.vmem [shape: f32[1,64], index: 4, kind: input, shape index: {}]
  %s5 = inlined_call_operand.vmem [shape: f32[64,16], index: 5, kind: input, shape index: {}]
  %s6 = inlined_call_operand.vmem [shape: f32[1,16], index: 6, kind: input, shape index: {}]
  %s7 = inlined_call_operand.vmem [shape: f32[16,3], index: 7, kind: input, shape index: {}]
  %s8 = inlined_call_operand.vmem [shape: f32[1,3], index: 8, kind: input, shape index: {}]
  %s9 = inlined_call_operand.vmem [shape: f32[3,16], index: 9, kind: input, shape index: {}]
  %s10 = inlined_call_operand.vmem [shape: f32[1,16], index: 10, kind: input, shape index: {}]
  %s11 = inlined_call_operand.vmem [shape: f32[16,64], index: 11, kind: input, shape index: {}]
  %s12 = inlined_call_operand.vmem [shape: f32[1,64], index: 12, kind: input, shape index: {}]
  %s13 = inlined_call_operand.vmem [shape: f32[64,128], index: 13, kind: input, shape index: {}]
  %s14 = inlined_call_operand.vmem [shape: f32[1,128], index: 14, kind: input, shape index: {}]
  %s15 = inlined_call_operand.vmem [shape: bf16[128,784], index: 15, kind: input, shape index: {}]
  %s16 = inlined_call_operand.vmem [shape: f32[1,784], index: 16, kind: input, shape index: {}]
  %s17 = inlined_call_operand.vmem [shape: f32[16,3], index: 17, kind: output, shape index: {0}]
  %s18 = inlined_call_operand.hbm [shape: f32[16,784], index: 18, kind: output, shape index: {1}]
  %19 = xla_tuple %s17, %s18
  %s20 = sld [smem:[#allocation0]]
  $region86: #{autoencoder_forward.1} parent=0
    _
  %s22 = ssub.s32 1, %s20
  %s23 = scalar_select 0, %s22, %s20
  $region1: #{autoencoder_forward.1} parent=0
    #allocation2 [shape = 'u8[57344]{0}', space=vmem, size = 0xe000, scoped, tag = 'output window, operand 1, single buffered']
    #allocation3 [shape = 's32[1]{0}', space=sflag, size = 0x4, scoped, tag = 'scoped memory for autoencoder_forward.1']
    %24 = vsyncpa [#allocation3], 0
    // Predicated region
    $region2: #{autoencoder_forward.1} parent=1 // pred_check
      _
    $region3: #{autoencoder_forward.1} parent=1 // pred_check_branch
      %26 = sbr.rel (0) target = $region5
    $region4: #{autoencoder_forward.1} parent=1 // pred_region
      _
    $region5: #{autoencoder_forward.1} parent=1 // pred_fallthru
      _
    // Predicated region
    $region6: #{autoencoder_forward.1} parent=1 // pred_check
      _
    $region7: #{autoencoder_forward.1} parent=1 // pred_check_branch
      %28 = sbr.rel (0) target = $region9
    $region8: #{autoencoder_forward.1} parent=1 // pred_region
      _
    $region9: #{autoencoder_forward.1} parent=1 // pred_fallthru
      _
    // Predicated region
    $region10: #{autoencoder_forward.1} parent=1 // pred_check
      _
    $region11: #{autoencoder_forward.1} parent=1 // pred_check_branch
      %30 = sbr.rel (0) target = $region13
    $region12: #{autoencoder_forward.1} parent=1 // pred_region
      _
    $region13: #{autoencoder_forward.1} parent=1 // pred_fallthru
      _
    // Predicated region
    $region14: #{autoencoder_forward.1} parent=1 // pred_check
      _
    $region15: #{autoencoder_forward.1} parent=1 // pred_check_branch
      %32 = sbr.rel (0) target = $region17
    $region16: #{autoencoder_forward.1} parent=1 // pred_region
      _
    $region17: #{autoencoder_forward.1} parent=1 // pred_fallthru
      _
    // Predicated region
    $region18: #{autoencoder_forward.1} parent=1 // pred_check
      _
    $region19: #{autoencoder_forward.1} parent=1 // pred_check_branch
      %34 = sbr.rel (0) target = $region21
    $region20: #{autoencoder_forward.1} parent=1 // pred_region
      _
    $region21: #{autoencoder_forward.1} parent=1 // pred_fallthru
      _
    // Predicated region
    $region22: #{autoencoder_forward.1} parent=1 // pred_check
      _
    $region23: #{autoencoder_forward.1} parent=1 // pred_check_branch
      %36 = sbr.rel (0) target = $region25
    $region24: #{autoencoder_forward.1} parent=1 // pred_region
      _
    $region25: #{autoencoder_forward.1} parent=1 // pred_fallthru
      _
    // Predicated region
    $region26: #{autoencoder_forward.1} parent=1 // pred_check
      _
    $region27: #{autoencoder_forward.1} parent=1 // pred_check_branch
      %38 = sbr.rel (0) target = $region29
    $region28: #{autoencoder_forward.1} parent=1 // pred_region
      _
    $region29: #{autoencoder_forward.1} parent=1 // pred_fallthru
      _
    // Predicated region
    $region30: #{autoencoder_forward.1} parent=1 // pred_check
      _
    $region31: #{autoencoder_forward.1} parent=1 // pred_check_branch
      %40 = sbr.rel (0) target = $region33
    $region32: #{autoencoder_forward.1} parent=1 // pred_region
      _
    $region33: #{autoencoder_forward.1} parent=1 // pred_fallthru
      _
    // Predicated region
    $region34: #{autoencoder_forward.1} parent=1 // pred_check
      _
    $region35: #{autoencoder_forward.1} parent=1 // pred_check_branch
      %42 = sbr.rel (0) target = $region37
    $region36: #{autoencoder_forward.1} parent=1 // pred_region
      _
    $region37: #{autoencoder_forward.1} parent=1 // pred_fallthru
      _
    // Predicated region
    $region38: #{autoencoder_forward.1} parent=1 // pred_check
      _
    $region39: #{autoencoder_forward.1} parent=1 // pred_check_branch
      %44 = sbr.rel (0) target = $region41
    $region40: #{autoencoder_forward.1} parent=1 // pred_region
      _
    $region41: #{autoencoder_forward.1} parent=1 // pred_fallthru
      _
    // Predicated region
    $region42: #{autoencoder_forward.1} parent=1 // pred_check
      _
    $region43: #{autoencoder_forward.1} parent=1 // pred_check_branch
      %46 = sbr.rel (0) target = $region45
    $region44: #{autoencoder_forward.1} parent=1 // pred_region
      _
    $region45: #{autoencoder_forward.1} parent=1 // pred_fallthru
      _
    // Predicated region
    $region46: #{autoencoder_forward.1} parent=1 // pred_check
      _
    $region47: #{autoencoder_forward.1} parent=1 // pred_check_branch
      %48 = sbr.rel (0) target = $region49
    $region48: #{autoencoder_forward.1} parent=1 // pred_region
      _
    $region49: #{autoencoder_forward.1} parent=1 // pred_fallthru
      _
    // Predicated region
    $region50: #{autoencoder_forward.1} parent=1 // pred_check
      _
    $region51: #{autoencoder_forward.1} parent=1 // pred_check_branch
      %50 = sbr.rel (0) target = $region53
    $region52: #{autoencoder_forward.1} parent=1 // pred_region
      _
    $region53: #{autoencoder_forward.1} parent=1 // pred_fallthru
      _
    // Predicated region
    $region54: #{autoencoder_forward.1} parent=1 // pred_check
      _
    $region55: #{autoencoder_forward.1} parent=1 // pred_check_branch
      %52 = sbr.rel (0) target = $region57
    $region56: #{autoencoder_forward.1} parent=1 // pred_region
      _
    $region57: #{autoencoder_forward.1} parent=1 // pred_fallthru
      _
    // Predicated region
    $region58: #{autoencoder_forward.1} parent=1 // pred_check
      _
    $region59: #{autoencoder_forward.1} parent=1 // pred_check_branch
      %54 = sbr.rel (0) target = $region61
    $region60: #{autoencoder_forward.1} parent=1 // pred_region
      _
    $region61: #{autoencoder_forward.1} parent=1 // pred_fallthru
      _
    // Predicated region
    $region62: #{autoencoder_forward.1} parent=1 // pred_check
      _
    $region63: #{autoencoder_forward.1} parent=1 // pred_check_branch
      %56 = sbr.rel (0) target = $region65
    $region64: #{autoencoder_forward.1} parent=1 // pred_region
      _
    $region65: #{autoencoder_forward.1} parent=1 // pred_fallthru
      _
    // Predicated region
    $region66: #{autoencoder_forward.1} parent=1 // pred_check
      _
    $region67: #{autoencoder_forward.1} parent=1 // pred_check_branch
      %58 = sbr.rel (0) target = $region69
    $region68: #{autoencoder_forward.1} parent=1 // pred_region
      _
    $region69: #{autoencoder_forward.1} parent=1 // pred_fallthru
      _
    %v60 = vld [vmem:[%s0] sm:$0xff]
    %v61 = vld [vmem:[%s0 + $0x8] sm:$0xff]
    %v62 = vld [vmem:[%s0 + $0x10] sm:$0xff]
    %v63 = vld [vmem:[%s0 + $0x18] sm:$0xff]
    %v64 = vld [vmem:[%s0 + $0x20] sm:$0xff]
    %v65 = vld [vmem:[%s0 + $0x28] sm:$0xff]
    %v66 = vld [vmem:[%s0 + $0x30] sm:$0xff]
    %v67 = vld [vmem:[%s0 + $0x38] sm:$0xff]
    %v68 = vld [vmem:[%s0 + $0x40] sm:$0xff]
    %v69 = vld [vmem:[%s0 + $0x48] sm:$0xff]
    %v70 = vld [vmem:[%s0 + $0x50] sm:$0xff]
    %v71 = vld [vmem:[%s0 + $0x58] sm:$0xff]
    %v72 = vld [vmem:[%s0 + $0x60] sm:$0xff]
    %v73 = vld [vmem:[%s0 + $0x68] sm:$0xff]
    %v74 = vld [vmem:[%s1] sm:$0xf]
    %v75 = vld [vmem:[%s1 + $0x4] sm:$0xf]
    %v76 = vld [vmem:[%s1 + $0x8] sm:$0xf]
    %v77 = vld [vmem:[%s1 + $0xc] sm:$0xf]
    %v78 = vld [vmem:[%s1 + $0x10] sm:$0xf]
    %v79 = vld [vmem:[%s1 + $0x14] sm:$0xf]
    %v80 = vld [vmem:[%s1 + $0x18] sm:$0xf]
    %v81 = vld [vmem:[%s1 + $0x1c] sm:$0xf]
    %v82 = vld [vmem:[%s1 + $0x20] sm:$0xf]
    %v83 = vld [vmem:[%s1 + $0x24] sm:$0xf]
    %v84 = vld [vmem:[%s1 + $0x28] sm:$0xf]
    %v85 = vld [vmem:[%s1 + $0x2c] sm:$0xf]
    %v86 = vld [vmem:[%s1 + $0x30] sm:$0xf]
    %v87 = vld [vmem:[%s1 + $0x34] sm:$0xf]
    %v88 = vld [vmem:[%s1 + $0x38] sm:$0xf]
    %v89 = vld [vmem:[%s1 + $0x3c] sm:$0xf]
    %v90 = vld [vmem:[%s1 + $0x40] sm:$0xf]
    %v91 = vld [vmem:[%s1 + $0x44] sm:$0xf]
    %v92 = vld [vmem:[%s1 + $0x48] sm:$0xf]
    %v93 = vld [vmem:[%s1 + $0x4c] sm:$0xf]
    %v94 = vld [vmem:[%s1 + $0x50] sm:$0xf]
    %v95 = vld [vmem:[%s1 + $0x54] sm:$0xf]
    %v96 = vld [vmem:[%s1 + $0x58] sm:$0xf]
    %v97 = vld [vmem:[%s1 + $0x5c] sm:$0xf]
    %v98 = vld [vmem:[%s1 + $0x60] sm:$0xf]
    %v99 = vld [vmem:[%s1 + $0x64] sm:$0xf]
    %v100 = vld [vmem:[%s1 + $0x68] sm:$0xf]
    %v101 = vld [vmem:[%s1 + $0x6c] sm:$0xf]
    %v102 = vld [vmem:[%s1 + $0x70] sm:$0xf]
    %v103 = vld [vmem:[%s1 + $0x74] sm:$0xf]
    %v104 = vld [vmem:[%s1 + $0x78] sm:$0xf]
    %v105 = vld [vmem:[%s1 + $0x7c] sm:$0xf]
    %v106 = vld [vmem:[%s1 + $0x80] sm:$0xf]
    %v107 = vld [vmem:[%s1 + $0x84] sm:$0xf]
    %v108 = vld [vmem:[%s1 + $0x88] sm:$0xf]
    %v109 = vld [vmem:[%s1 + $0x8c] sm:$0xf]
    %v110 = vld [vmem:[%s1 + $0x90] sm:$0xf]
    %v111 = vld [vmem:[%s1 + $0x94] sm:$0xf]
    %v112 = vld [vmem:[%s1 + $0x98] sm:$0xf]
    %v113 = vld [vmem:[%s1 + $0x9c] sm:$0xf]
    %v114 = vld [vmem:[%s1 + $0xa0] sm:$0xf]
    %v115 = vld [vmem:[%s1 + $0xa4] sm:$0xf]
    %v116 = vld [vmem:[%s1 + $0xa8] sm:$0xf]
    %v117 = vld [vmem:[%s1 + $0xac] sm:$0xf]
    %v118 = vld [vmem:[%s1 + $0xb0] sm:$0xf]
    %v119 = vld [vmem:[%s1 + $0xb4] sm:$0xf]
    %v120 = vld [vmem:[%s1 + $0xb8] sm:$0xf]
    %v121 = vld [vmem:[%s1 + $0xbc] sm:$0xf]
    %v122 = vld [vmem:[%s1 + $0xc0] sm:$0xf]
    %v123 = vld [vmem:[%s1 + $0xc4] sm:$0xf]
    %v124 = vld [vmem:[%s1 + $0xc8] sm:$0xf]
    %v125 = vld [vmem:[%s1 + $0xcc] sm:$0xf]
    %v126 = vld [vmem:[%s1 + $0xd0] sm:$0xf]
    %v127 = vld [vmem:[%s1 + $0xd4] sm:$0xf]
    %v128 = vld [vmem:[%s1 + $0xd8] sm:$0xf]
    %v129 = vld [vmem:[%s1 + $0xdc] sm:$0xf]
    %v130 = vld [vmem:[%s1 + $0xe0] sm:$0xf]
    %v131 = vld [vmem:[%s1 + $0xe4] sm:$0xf]
    %v132 = vld [vmem:[%s1 + $0xe8] sm:$0xf]
    %v133 = vld [vmem:[%s1 + $0xec] sm:$0xf]
    %v134 = vld [vmem:[%s1 + $0xf0] sm:$0xf]
    %v135 = vld [vmem:[%s1 + $0xf4] sm:$0xf]
    %v136 = vld [vmem:[%s1 + $0xf8] sm:$0xf]
    %v137 = vld [vmem:[%s1 + $0xfc] sm:$0xf]
    %v138 = vld [vmem:[%s1 + $0x100] sm:$0xf]
    %v139 = vld [vmem:[%s1 + $0x104] sm:$0xf]
    %v140 = vld [vmem:[%s1 + $0x108] sm:$0xf]
    %v141 = vld [vmem:[%s1 + $0x10c] sm:$0xf]
    %v142 = vld [vmem:[%s1 + $0x110] sm:$0xf]
    %v143 = vld [vmem:[%s1 + $0x114] sm:$0xf]
    %v144 = vld [vmem:[%s1 + $0x118] sm:$0xf]
    %v145 = vld [vmem:[%s1 + $0x11c] sm:$0xf]
    %v146 = vld [vmem:[%s1 + $0x120] sm:$0xf]
    %v147 = vld [vmem:[%s1 + $0x124] sm:$0xf]
    %v148 = vld [vmem:[%s1 + $0x128] sm:$0xf]
    %v149 = vld [vmem:[%s1 + $0x12c] sm:$0xf]
    %v150 = vld [vmem:[%s1 + $0x130] sm:$0xf]
    %v151 = vld [vmem:[%s1 + $0x134] sm:$0xf]
    %v152 = vld [vmem:[%s1 + $0x138] sm:$0xf]
    %v153 = vld [vmem:[%s1 + $0x13c] sm:$0xf]
    %v154 = vld [vmem:[%s1 + $0x140] sm:$0xf]
    %v155 = vld [vmem:[%s1 + $0x144] sm:$0xf]
    %v156 = vld [vmem:[%s1 + $0x148] sm:$0xf]
    %v157 = vld [vmem:[%s1 + $0x14c] sm:$0xf]
    %v158 = vld [vmem:[%s1 + $0x150] sm:$0xf]
    %v159 = vld [vmem:[%s1 + $0x154] sm:$0xf]
    %v160 = vld [vmem:[%s1 + $0x158] sm:$0xf]
    %v161 = vld [vmem:[%s1 + $0x15c] sm:$0xf]
    %v162 = vld [vmem:[%s1 + $0x160] sm:$0xf]
    %v163 = vld [vmem:[%s1 + $0x164] sm:$0xf]
    %v164 = vld [vmem:[%s1 + $0x168] sm:$0xf]
    %v165 = vld [vmem:[%s1 + $0x16c] sm:$0xf]
    %v166 = vld [vmem:[%s1 + $0x170] sm:$0xf]
    %v167 = vld [vmem:[%s1 + $0x174] sm:$0xf]
    %v168 = vld [vmem:[%s1 + $0x178] sm:$0xf]
    %v169 = vld [vmem:[%s1 + $0x17c] sm:$0xf]
    %v170 = vld [vmem:[%s1 + $0x180] sm:$0xf]
    %v171 = vld [vmem:[%s1 + $0x184] sm:$0xf]
    %v172 = vld [vmem:[%s2] sm:$0x1]
    %v173 = vpack.c.bf16 %v67, %v60
    %v174 = vpack.c.bf16 %v68, %v61
    %v175 = vpack.c.bf16 %v69, %v62
    %v176 = vpack.c.bf16 %v70, %v63
    %v177 = vpack.c.bf16 %v71, %v64
    %v178 = vpack.c.bf16 %v72, %v65
    %v179 = vpack.c.bf16 %v73, %v66
    %v181 = vlaneseq
    %v182 = vshrl.u32 %v181, 7
    %v183 = vsub.s32 0, %v182
    %v184 = vrot.slane %v172, %v183
    %v284 = vunpack.c.l.b16 %v74
    %v285 = vunpack.c.l.b16 %v75
    %v286 = vunpack.c.l.b16 %v76
    %v287 = vunpack.c.l.b16 %v77
    %v288 = vunpack.c.l.b16 %v78
    %v289 = vunpack.c.l.b16 %v79
    %v290 = vunpack.c.l.b16 %v80
    %v291 = vunpack.c.l.b16 %v81
    %v292 = vunpack.c.l.b16 %v82
    %v293 = vunpack.c.l.b16 %v83
    %v294 = vunpack.c.l.b16 %v84
    %v295 = vunpack.c.l.b16 %v85
    %v296 = vunpack.c.l.b16 %v86
    %v297 = vunpack.c.l.b16 %v87
    %v298 = vunpack.c.l.b16 %v88
    %v299 = vunpack.c.l.b16 %v89
    %v300 = vunpack.c.l.b16 %v90
    %v301 = vunpack.c.l.b16 %v91
    %v302 = vunpack.c.l.b16 %v92
    %v303 = vunpack.c.l.b16 %v93
    %v304 = vunpack.c.l.b16 %v94
    %v305 = vunpack.c.l.b16 %v95
    %v306 = vunpack.c.l.b16 %v96
    %v307 = vunpack.c.l.b16 %v97
    %v308 = vunpack.c.l.b16 %v98
    %v309 = vunpack.c.l.b16 %v99
    %v310 = vunpack.c.l.b16 %v100
    %v311 = vunpack.c.l.b16 %v101
    %v312 = vunpack.c.l.b16 %v102
    %v313 = vunpack.c.l.b16 %v103
    %v314 = vunpack.c.l.b16 %v104
    %v315 = vunpack.c.l.b16 %v105
    %v316 = vunpack.c.l.b16 %v106
    %v317 = vunpack.c.l.b16 %v107
    %v318 = vunpack.c.l.b16 %v108
    %v319 = vunpack.c.l.b16 %v109
    %v320 = vunpack.c.l.b16 %v110
    %v321 = vunpack.c.l.b16 %v111
    %v322 = vunpack.c.l.b16 %v112
    %v323 = vunpack.c.l.b16 %v113
    %v324 = vunpack.c.l.b16 %v114
    %v325 = vunpack.c.l.b16 %v115
    %v326 = vunpack.c.l.b16 %v116
    %v327 = vunpack.c.l.b16 %v117
    %v328 = vunpack.c.l.b16 %v118
    %v329 = vunpack.c.l.b16 %v119
    %v330 = vunpack.c.l.b16 %v120
    %v331 = vunpack.c.l.b16 %v121
    %v332 = vunpack.c.l.b16 %v122
    %v333 = vunpack.c.l.b16 %v123
    %v334 = vunpack.c.l.b16 %v124
    %v335 = vunpack.c.l.b16 %v125
    %v336 = vunpack.c.l.b16 %v126
    %v337 = vunpack.c.l.b16 %v127
    %v338 = vunpack.c.l.b16 %v128
    %v339 = vunpack.c.l.b16 %v129
    %v340 = vunpack.c.l.b16 %v130
    %v341 = vunpack.c.l.b16 %v131
    %v342 = vunpack.c.l.b16 %v132
    %v343 = vunpack.c.l.b16 %v133
    %v344 = vunpack.c.l.b16 %v134
    %v345 = vunpack.c.l.b16 %v135
    %v346 = vunpack.c.l.b16 %v136
    %v347 = vunpack.c.l.b16 %v137
    %v348 = vunpack.c.l.b16 %v138
    %v349 = vunpack.c.l.b16 %v139
    %v350 = vunpack.c.l.b16 %v140
    %v351 = vunpack.c.l.b16 %v141
    %v352 = vunpack.c.l.b16 %v142
    %v353 = vunpack.c.l.b16 %v143
    %v354 = vunpack.c.l.b16 %v144
    %v355 = vunpack.c.l.b16 %v145
    %v356 = vunpack.c.l.b16 %v146
    %v357 = vunpack.c.l.b16 %v147
    %v358 = vunpack.c.l.b16 %v148
    %v359 = vunpack.c.l.b16 %v149
    %v360 = vunpack.c.l.b16 %v150
    %v361 = vunpack.c.l.b16 %v151
    %v362 = vunpack.c.l.b16 %v152
    %v363 = vunpack.c.l.b16 %v153
    %v364 = vunpack.c.l.b16 %v154
    %v365 = vunpack.c.l.b16 %v155
    %v366 = vunpack.c.l.b16 %v156
    %v367 = vunpack.c.l.b16 %v157
    %v368 = vunpack.c.l.b16 %v158
    %v369 = vunpack.c.l.b16 %v159
    %v370 = vunpack.c.l.b16 %v160
    %v371 = vunpack.c.l.b16 %v161
    %v372 = vunpack.c.l.b16 %v162
    %v373 = vunpack.c.l.b16 %v163
    %v374 = vunpack.c.l.b16 %v164
    %v375 = vunpack.c.l.b16 %v165
    %v376 = vunpack.c.l.b16 %v166
    %v377 = vunpack.c.l.b16 %v167
    %v378 = vunpack.c.l.b16 %v168
    %v379 = vunpack.c.l.b16 %v169
    %v380 = vunpack.c.l.b16 %v170
    %v381 = vunpack.c.l.b16 %v171
    %v382 = vpack.c.b16 %v285, %v284
    %v383 = vpack.c.b16 %v287, %v286
    %v384 = vpack.c.b16 %v289, %v288
    %v385 = vpack.c.b16 %v291, %v290
    %v386 = vpack.c.b16 %v293, %v292
    %v387 = vpack.c.b16 %v295, %v294
    %v388 = vpack.c.b16 %v297, %v296
    %v389 = vpack.c.b16 %v299, %v298
    %v390 = vpack.c.b16 %v301, %v300
    %v391 = vpack.c.b16 %v303, %v302
    %v392 = vpack.c.b16 %v305, %v304
    %v393 = vpack.c.b16 %v307, %v306
    %v394 = vpack.c.b16 %v309, %v308
    %v395 = vpack.c.b16 %v311, %v310
    %v396 = vpack.c.b16 %v313, %v312
    %v397 = vpack.c.b16 %v315, %v314
    %v398 = vpack.c.b16 %v317, %v316
    %v399 = vpack.c.b16 %v319, %v318
    %v400 = vpack.c.b16 %v321, %v320
    %v401 = vpack.c.b16 %v323, %v322
    %v402 = vpack.c.b16 %v325, %v324
    %v403 = vpack.c.b16 %v327, %v326
    %v404 = vpack.c.b16 %v329, %v328
    %v405 = vpack.c.b16 %v331, %v330
    %v406 = vpack.c.b16 %v333, %v332
    %v407 = vpack.c.b16 %v335, %v334
    %v408 = vpack.c.b16 %v337, %v336
    %v409 = vpack.c.b16 %v339, %v338
    %v410 = vpack.c.b16 %v341, %v340
    %v411 = vpack.c.b16 %v343, %v342
    %v412 = vpack.c.b16 %v345, %v344
    %v413 = vpack.c.b16 %v347, %v346
    %v414 = vpack.c.b16 %v349, %v348
    %v415 = vpack.c.b16 %v351, %v350
    %v416 = vpack.c.b16 %v353, %v352
    %v417 = vpack.c.b16 %v355, %v354
    %v418 = vpack.c.b16 %v357, %v356
    %v419 = vpack.c.b16 %v359, %v358
    %v420 = vpack.c.b16 %v361, %v360
    %v421 = vpack.c.b16 %v363, %v362
    %v422 = vpack.c.b16 %v365, %v364
    %v423 = vpack.c.b16 %v367, %v366
    %v424 = vpack.c.b16 %v369, %v368
    %v425 = vpack.c.b16 %v371, %v370
    %v426 = vpack.c.b16 %v373, %v372
    %v427 = vpack.c.b16 %v375, %v374
    %v428 = vpack.c.b16 %v377, %v376
    %v429 = vpack.c.b16 %v379, %v378
    %v430 = vpack.c.b16 %v381, %v380
    %vm480 = vcmask 130048
    %v482 = vsel %vm480, %v179, 0
    %484 = vmatprep.subr.bf16.mxu0 0
    %485 = vmatpush1.bf16.msra.mxu0 %v382
    %486 = vmatprep.subr.bf16.mxu0 0
    %487 = vmatpush1.bf16.msra.mxu0 %v383
    %488 = vmatprep.subr.bf16.mxu0 0
    %489 = vmatpush1.bf16.msra.mxu0 %v384
    %490 = vmatprep.subr.bf16.mxu0 0
    %491 = vmatpush1.bf16.msra.mxu0 %v385
    %492 = vmatprep.subr.bf16.mxu0 0
    %493 = vmatpush1.bf16.msra.mxu0 %v386
    %494 = vmatprep.subr.bf16.mxu0 0
    %495 = vmatpush1.bf16.msra.mxu0 %v387
    %496 = vmatprep.subr.bf16.mxu0 0
    %497 = vmatpush1.bf16.msra.mxu0 %v388
    %498 = vmatprep.subr.bf16.mxu0 0
    %499 = vmatpush1.bf16.msra.mxu0 %v389
    %500 = vmatprep.subr.bf16.mxu0 0
    %501 = vmatpush1.bf16.msra.mxu0 %v390
    %502 = vmatprep.subr.bf16.mxu0 0
    %503 = vmatpush1.bf16.msra.mxu0 %v391
    %504 = vmatprep.subr.bf16.mxu0 0
    %505 = vmatpush1.bf16.msra.mxu0 %v392
    %506 = vmatprep.subr.bf16.mxu0 0
    %507 = vmatpush1.bf16.msra.mxu0 %v393
    %508 = vmatprep.subr.bf16.mxu0 0
    %509 = vmatpush1.bf16.msra.mxu0 %v394
    %510 = vmatprep.subr.bf16.mxu0 0
    %511 = vmatpush1.bf16.msra.mxu0 %v395
    %512 = vmatprep.subr.bf16.mxu0 0
    %513 = vmatpush1.bf16.msra.mxu0 %v396
    %514 = vmatprep.subr.bf16.mxu0 0
    %515 = vmatpush1.bf16.msra.mxu0 %v397
    %516 = vmatprep.mubr.bf16.mxu0 %v174
    %517 = vmatmul.mubr.bf16.gmra.mrb[0].mxu0 %v173
    %v518 = vpop.f32.mrb[0].mxu0
    %v519 = vadd.f32 %v184, %v518
    %v520 = vpop.f32.mrb[0].mxu0
    %v521 = vpop.f32.mrb[0].mxu0
    %v522 = vadd.f32 %v184, %v521
    %v523 = vpop.f32.mrb[0].mxu0
    %524 = vdwg.mxu0
    %525 = vmatprep.subr.bf16.mxu0 0
    %526 = vmatpush1.bf16.msra.mxu0 %v398
    %527 = vmatprep.subr.bf16.mxu0 0
    %528 = vmatpush1.bf16.msra.mxu0 %v399
    %529 = vmatprep.subr.bf16.mxu0 0
    %530 = vmatpush1.bf16.msra.mxu0 %v400
    %531 = vmatprep.subr.bf16.mxu0 0
    %532 = vmatpush1.bf16.msra.mxu0 %v401
    %533 = vmatprep.subr.bf16.mxu0 0
    %534 = vmatpush1.bf16.msra.mxu0 %v402
    %535 = vmatprep.subr.bf16.mxu0 0
    %536 = vmatpush1.bf16.msra.mxu0 %v403
    %537 = vmatprep.subr.bf16.mxu0 0
    %538 = vmatpush1.bf16.msra.mxu0 %v404
    %539 = vmatprep.subr.bf16.mxu0 0
    %540 = vmatpush1.bf16.msra.mxu0 %v405
    %541 = vmatprep.subr.bf16.mxu0 0
    %542 = vmatpush1.bf16.msra.mxu0 %v406
    %543 = vmatprep.subr.bf16.mxu0 0
    %544 = vmatpush1.bf16.msra.mxu0 %v407
    %545 = vmatprep.subr.bf16.mxu0 0
    %546 = vmatpush1.bf16.msra.mxu0 %v408
    %547 = vmatprep.subr.bf16.mxu0 0
    %548 = vmatpush1.bf16.msra.mxu0 %v409
    %549 = vmatprep.subr.bf16.mxu0 0
    %550 = vmatpush1.bf16.msra.mxu0 %v410
    %551 = vmatprep.subr.bf16.mxu0 0
    %552 = vmatpush1.bf16.msra.mxu0 %v411
    %553 = vmatprep.subr.bf16.mxu0 0
    %554 = vmatpush1.bf16.msra.mxu0 %v412
    %555 = vmatprep.subr.bf16.mxu0 0
    %556 = vmatpush1.bf16.msra.mxu0 %v413
    %557 = vmatprep.mubr.bf16.mxu0 %v176
    %558 = vmatmul.mubr.bf16.gmra.mrb[0].mxu0 %v175
    %v559 = vpop.f32.mrb[0].mxu0
    %v560 = vadd.f32 %v519, %v559
    %v561 = vpop.f32.mrb[0].mxu0
    %v562 = vpop.f32.mrb[0].mxu0
    %v563 = vadd.f32 %v522, %v562
    %v564 = vpop.f32.mrb[0].mxu0
    %565 = vdwg.mxu0
    %566 = vmatprep.subr.bf16.mxu0 0
    %567 = vmatpush1.bf16.msra.mxu0 %v414
    %568 = vmatprep.subr.bf16.mxu0 0
    %569 = vmatpush1.bf16.msra.mxu0 %v415
    %570 = vmatprep.subr.bf16.mxu0 0
    %571 = vmatpush1.bf16.msra.mxu0 %v416
    %572 = vmatprep.subr.bf16.mxu0 0
    %573 = vmatpush1.bf16.msra.mxu0 %v417
    %574 = vmatprep.subr.bf16.mxu0 0
    %575 = vmatpush1.bf16.msra.mxu0 %v418
    %576 = vmatprep.subr.bf16.mxu0 0
    %577 = vmatpush1.bf16.msra.mxu0 %v419
    %578 = vmatprep.subr.bf16.mxu0 0
    %579 = vmatpush1.bf16.msra.mxu0 %v420
    %580 = vmatprep.subr.bf16.mxu0 0
    %581 = vmatpush1.bf16.msra.mxu0 %v421
    %582 = vmatprep.subr.bf16.mxu0 0
    %583 = vmatpush1.bf16.msra.mxu0 %v422
    %584 = vmatprep.subr.bf16.mxu0 0
    %585 = vmatpush1.bf16.msra.mxu0 %v423
    %586 = vmatprep.subr.bf16.mxu0 0
    %587 = vmatpush1.bf16.msra.mxu0 %v424
    %588 = vmatprep.subr.bf16.mxu0 0
    %589 = vmatpush1.bf16.msra.mxu0 %v425
    %590 = vmatprep.subr.bf16.mxu0 0
    %591 = vmatpush1.bf16.msra.mxu0 %v426
    %592 = vmatprep.subr.bf16.mxu0 0
    %593 = vmatpush1.bf16.msra.mxu0 %v427
    %594 = vmatprep.subr.bf16.mxu0 0
    %595 = vmatpush1.bf16.msra.mxu0 %v428
    %596 = vmatprep.subr.bf16.mxu0 0
    %597 = vmatpush1.bf16.msra.mxu0 %v429
    %598 = vmatprep.mubr.bf16.mxu0 %v178
    %599 = vmatmul.mubr.bf16.gmra.mrb[0].mxu0 %v177
    %v600 = vpop.f32.mrb[0].mxu0
    %v601 = vadd.f32 %v560, %v600
    %v602 = vpop.f32.mrb[0].mxu0
    %v603 = vpop.f32.mrb[0].mxu0
    %v604 = vadd.f32 %v563, %v603
    %v605 = vpop.f32.mrb[0].mxu0
    %606 = vdwg.mxu0
    %607 = vmatprep.subr.bf16.mxu0 0
    %608 = vmatpush1.bf16.msra.mxu0 %v430
    %609 = vmatprep.subr.bf16.mxu0 0
    %610 = vmatpush1.bf16.msra.mxu0 0
    %611 = vmatprep.subr.bf16.mxu0 0
    %612 = vmatpush1.bf16.msra.mxu0 0
    %613 = vmatprep.subr.bf16.mxu0 0
    %614 = vmatpush1.bf16.msra.mxu0 0
    %615 = vmatprep.subr.bf16.mxu0 0
    %616 = vmatpush1.bf16.msra.mxu0 0
    %617 = vmatprep.subr.bf16.mxu0 0
    %618 = vmatpush1.bf16.msra.mxu0 0
    %619 = vmatprep.subr.bf16.mxu0 0
    %620 = vmatpush1.bf16.msra.mxu0 0
    %621 = vmatprep.subr.bf16.mxu0 0
    %622 = vmatpush1.bf16.msra.mxu0 0
    %623 = vmatprep.subr.bf16.mxu0 0
    %624 = vmatpush1.bf16.msra.mxu0 0
    %625 = vmatprep.subr.bf16.mxu0 0
    %626 = vmatpush1.bf16.msra.mxu0 0
    %627 = vmatprep.subr.bf16.mxu0 0
    %628 = vmatpush1.bf16.msra.mxu0 0
    %629 = vmatprep.subr.bf16.mxu0 0
    %630 = vmatpush1.bf16.msra.mxu0 0
    %631 = vmatprep.subr.bf16.mxu0 0
    %632 = vmatpush1.bf16.msra.mxu0 0
    %633 = vmatprep.subr.bf16.mxu0 0
    %634 = vmatpush1.bf16.msra.mxu0 0
    %635 = vmatprep.subr.bf16.mxu0 0
    %636 = vmatpush1.bf16.msra.mxu0 0
    %637 = vmatprep.subr.bf16.mxu0 0
    %638 = vmatpush1.bf16.msra.mxu0 0
    %639 = vmatprep.mubr.bf16.mxu0 0
    %640 = vmatmul.mubr.bf16.gmra.mrb[0].mxu0 %v482
    %v641 = vpop.f32.mrb[0].mxu0
    %v642 = vadd.f32 %v601, %v641
    %v643 = vpop.f32.mrb[0].mxu0
    %v644 = vpop.f32.mrb[0].mxu0
    %v645 = vadd.f32 %v604, %v644
    %v646 = vpop.f32.mrb[0].mxu0
    %647 = vdwg.mxu0
    %v648 = vtanh.pop %v642
    %v649 = vtanh.pop %v645
    %v650 = vld [vmem:[%s3] sm:$0xff]
    %v651 = vld [vmem:[%s3 + $0x8] sm:$0xff]
    %v652 = vld [vmem:[%s3 + $0x10] sm:$0xff]
    %v653 = vld [vmem:[%s3 + $0x18] sm:$0xff]
    %v654 = vld [vmem:[%s3 + $0x20] sm:$0xff]
    %v655 = vld [vmem:[%s3 + $0x28] sm:$0xff]
    %v656 = vld [vmem:[%s3 + $0x30] sm:$0xff]
    %v657 = vld [vmem:[%s3 + $0x38] sm:$0xff]
    %v658 = vld [vmem:[%s3 + $0x40] sm:$0xff]
    %v659 = vld [vmem:[%s3 + $0x48] sm:$0xff]
    %v660 = vld [vmem:[%s3 + $0x50] sm:$0xff]
    %v661 = vld [vmem:[%s3 + $0x58] sm:$0xff]
    %v662 = vld [vmem:[%s3 + $0x60] sm:$0xff]
    %v663 = vld [vmem:[%s3 + $0x68] sm:$0xff]
    %v664 = vld [vmem:[%s3 + $0x70] sm:$0xff]
    %v665 = vld [vmem:[%s3 + $0x78] sm:$0xff]
    %v666 = vld [vmem:[%s4] sm:$0x1]
    %v668 = vlaneseq
    %v669 = vshrl.u32 %v668, 7
    %v670 = vsub.s32 0, %v669
    %v671 = vrot.slane %v666, %v670
    %673 = vmatprep.subr.mxu0 0.0
    %674 = vmatpush1.msra.mxu0 %v650
    %675 = vmatprep.subr.mxu0 0.0
    %676 = vmatpush1.msra.mxu0 %v651
    %677 = vmatprep.subr.mxu0 0.0
    %678 = vmatpush1.msra.mxu0 %v652
    %679 = vmatprep.subr.mxu0 0.0
    %680 = vmatpush1.msra.mxu0 %v653
    %681 = vmatprep.subr.mxu0 0.0
    %682 = vmatpush1.msra.mxu0 %v654
    %683 = vmatprep.subr.mxu0 0.0
    %684 = vmatpush1.msra.mxu0 %v655
    %685 = vmatprep.subr.mxu0 0.0
    %686 = vmatpush1.msra.mxu0 %v656
    %687 = vmatprep.subr.mxu0 0.0
    %688 = vmatpush1.msra.mxu0 %v657
    %689 = vmatprep.subr.mxu0 0.0
    %690 = vmatpush1.msra.mxu0 %v658
    %691 = vmatprep.subr.mxu0 0.0
    %692 = vmatpush1.msra.mxu0 %v659
    %693 = vmatprep.subr.mxu0 0.0
    %694 = vmatpush1.msra.mxu0 %v660
    %695 = vmatprep.subr.mxu0 0.0
    %696 = vmatpush1.msra.mxu0 %v661
    %697 = vmatprep.subr.mxu0 0.0
    %698 = vmatpush1.msra.mxu0 %v662
    %699 = vmatprep.subr.mxu0 0.0
    %700 = vmatpush1.msra.mxu0 %v663
    %701 = vmatprep.subr.mxu0 0.0
    %702 = vmatpush1.msra.mxu0 %v664
    %703 = vmatprep.subr.mxu0 0.0
    %704 = vmatpush1.msra.mxu0 %v665
    %705 = vmatprep.subr.mxu0 0.0
    %706 = vmatpush1.msra.mxu0 0.0
    %707 = vmatprep.subr.mxu0 0.0
    %708 = vmatpush1.msra.mxu0 0.0
    %709 = vmatprep.subr.mxu0 0.0
    %710 = vmatpush1.msra.mxu0 0.0
    %711 = vmatprep.subr.mxu0 0.0
    %712 = vmatpush1.msra.mxu0 0.0
    %713 = vmatprep.subr.mxu0 0.0
    %714 = vmatpush1.msra.mxu0 0.0
    %715 = vmatprep.subr.mxu0 0.0
    %716 = vmatpush1.msra.mxu0 0.0
    %717 = vmatprep.subr.mxu0 0.0
    %718 = vmatpush1.msra.mxu0 0.0
    %719 = vmatprep.subr.mxu0 0.0
    %720 = vmatpush1.msra.mxu0 0.0
    %721 = vmatprep.subr.mxu0 0.0
    %722 = vmatpush1.msra.mxu0 0.0
    %723 = vmatprep.subr.mxu0 0.0
    %724 = vmatpush1.msra.mxu0 0.0
    %725 = vmatprep.subr.mxu0 0.0
    %726 = vmatpush1.msra.mxu0 0.0
    %727 = vmatprep.subr.mxu0 0.0
    %728 = vmatpush1.msra.mxu0 0.0
    %729 = vmatprep.subr.mxu0 0.0
    %730 = vmatpush1.msra.mxu0 0.0
    %731 = vmatprep.subr.mxu0 0.0
    %732 = vmatpush1.msra.mxu0 0.0
    %733 = vmatprep.subr.mxu0 0.0
    %734 = vmatpush1.msra.mxu0 0.0
    %735 = vmatprep.subr.mxu0 0.0
    %736 = vmatpush1.msra.mxu0 0.0
    %737 = vmatprep.mubr.f32.mxu0 0.0
    %738 = vmatmul.mubr.f32.gmra.mrb[0].mxu0 %v648
    %v739 = vpop.f32.mrb[0].mxu0
    %v740 = vadd.f32 %v671, %v739
    %v741 = vpop.f32.mrb[0].mxu0
    %742 = vmatprep.mubr.f32.mxu0 0.0
    %743 = vmatmul.mubr.f32.gmra.mrb[0].mxu0 %v649
    %v744 = vpop.f32.mrb[0].mxu0
    %v745 = vadd.f32 %v671, %v744
    %v746 = vpop.f32.mrb[0].mxu0
    %747 = vdwg.mxu0
    %v748 = vtanh.pop %v740
    %v749 = vtanh.pop %v745
    %v750 = vld [vmem:[%s5] sm:$0xff]
    %v751 = vld [vmem:[%s5 + $0x8] sm:$0xff]
    %v752 = vld [vmem:[%s5 + $0x10] sm:$0xff]
    %v753 = vld [vmem:[%s5 + $0x18] sm:$0xff]
    %v754 = vld [vmem:[%s5 + $0x20] sm:$0xff]
    %v755 = vld [vmem:[%s5 + $0x28] sm:$0xff]
    %v756 = vld [vmem:[%s5 + $0x30] sm:$0xff]
    %v757 = vld [vmem:[%s5 + $0x38] sm:$0xff]
    %v758 = vld [vmem:[%s6] sm:$0x1]
    %v760 = vlaneseq
    %v761 = vshrl.u32 %v760, 7
    %v762 = vsub.s32 0, %v761
    %v763 = vrot.slane %v758, %v762
    %vm765 = vcmask 523264
    %v767 = vsel %vm765, %v748, 0
    %v770 = vsel %vm765, %v749, 0
    %772 = vmatprep.subr.mxu0 0.0
    %773 = vmatpush1.msra.mxu0 %v750
    %774 = vmatprep.subr.mxu0 0.0
    %775 = vmatpush1.msra.mxu0 %v751
    %776 = vmatprep.subr.mxu0 0.0
    %777 = vmatpush1.msra.mxu0 %v752
    %778 = vmatprep.subr.mxu0 0.0
    %779 = vmatpush1.msra.mxu0 %v753
    %780 = vmatprep.subr.mxu0 0.0
    %781 = vmatpush1.msra.mxu0 %v754
    %782 = vmatprep.subr.mxu0 0.0
    %783 = vmatpush1.msra.mxu0 %v755
    %784 = vmatprep.subr.mxu0 0.0
    %785 = vmatpush1.msra.mxu0 %v756
    %786 = vmatprep.subr.mxu0 0.0
    %787 = vmatpush1.msra.mxu0 %v757
    %788 = vmatprep.subr.mxu0 0.0
    %789 = vmatpush1.msra.mxu0 0.0
    %790 = vmatprep.subr.mxu0 0.0
    %791 = vmatpush1.msra.mxu0 0.0
    %792 = vmatprep.subr.mxu0 0.0
    %793 = vmatpush1.msra.mxu0 0.0
    %794 = vmatprep.subr.mxu0 0.0
    %795 = vmatpush1.msra.mxu0 0.0
    %796 = vmatprep.subr.mxu0 0.0
    %797 = vmatpush1.msra.mxu0 0.0
    %798 = vmatprep.subr.mxu0 0.0
    %799 = vmatpush1.msra.mxu0 0.0
    %800 = vmatprep.subr.mxu0 0.0
    %801 = vmatpush1.msra.mxu0 0.0
    %802 = vmatprep.subr.mxu0 0.0
    %803 = vmatpush1.msra.mxu0 0.0
    %804 = vmatprep.subr.mxu0 0.0
    %805 = vmatpush1.msra.mxu0 0.0
    %806 = vmatprep.subr.mxu0 0.0
    %807 = vmatpush1.msra.mxu0 0.0
    %808 = vmatprep.subr.mxu0 0.0
    %809 = vmatpush1.msra.mxu0 0.0
    %810 = vmatprep.subr.mxu0 0.0
    %811 = vmatpush1.msra.mxu0 0.0
    %812 = vmatprep.subr.mxu0 0.0
    %813 = vmatpush1.msra.mxu0 0.0
    %814 = vmatprep.subr.mxu0 0.0
    %815 = vmatpush1.msra.mxu0 0.0
    %816 = vmatprep.subr.mxu0 0.0
    %817 = vmatpush1.msra.mxu0 0.0
    %818 = vmatprep.subr.mxu0 0.0
    %819 = vmatpush1.msra.mxu0 0.0
    %820 = vmatprep.subr.mxu0 0.0
    %821 = vmatpush1.msra.mxu0 0.0
    %822 = vmatprep.subr.mxu0 0.0
    %823 = vmatpush1.msra.mxu0 0.0
    %824 = vmatprep.subr.mxu0 0.0
    %825 = vmatpush1.msra.mxu0 0.0
    %826 = vmatprep.subr.mxu0 0.0
    %827 = vmatpush1.msra.mxu0 0.0
    %828 = vmatprep.subr.mxu0 0.0
    %829 = vmatpush1.msra.mxu0 0.0
    %830 = vmatprep.subr.mxu0 0.0
    %831 = vmatpush1.msra.mxu0 0.0
    %832 = vmatprep.subr.mxu0 0.0
    %833 = vmatpush1.msra.mxu0 0.0
    %834 = vmatprep.subr.mxu0 0.0
    %835 = vmatpush1.msra.mxu0 0.0
    %836 = vmatprep.mubr.f32.mxu0 0.0
    %837 = vmatmul.mubr.f32.gmra.mrb[0].mxu0 %v767
    %v838 = vpop.f32.mrb[0].mxu0
    %v839 = vadd.f32 %v763, %v838
    %v840 = vpop.f32.mrb[0].mxu0
    %841 = vmatprep.mubr.f32.mxu0 0.0
    %842 = vmatmul.mubr.f32.gmra.mrb[0].mxu0 %v770
    %v843 = vpop.f32.mrb[0].mxu0
    %v844 = vadd.f32 %v763, %v843
    %v845 = vpop.f32.mrb[0].mxu0
    %846 = vdwg.mxu0
    %v847 = vtanh.pop %v839
    %v848 = vtanh.pop %v844
    %v849 = vld [vmem:[%s7] sm:$0xff]
    %v850 = vld [vmem:[%s7 + $0x8] sm:$0xff]
    %v851 = vld [vmem:[%s8] sm:$0x1]
    %v853 = vlaneseq
    %v854 = vshrl.u32 %v853, 7
    %v855 = vsub.s32 0, %v854
    %v856 = vrot.slane %v851, %v855
    %v859 = vsel %vm480, %v847, 0
    %v862 = vsel %vm480, %v848, 0
    %864 = vmatprep.subr.mxu0 0.0
    %865 = vmatpush1.msra.mxu0 %v849
    %866 = vmatprep.subr.mxu0 0.0
    %867 = vmatpush1.msra.mxu0 %v850
    %868 = vmatprep.subr.mxu0 0.0
    %869 = vmatpush1.msra.mxu0 0.0
    %870 = vmatprep.subr.mxu0 0.0
    %871 = vmatpush1.msra.mxu0 0.0
    %872 = vmatprep.subr.mxu0 0.0
    %873 = vmatpush1.msra.mxu0 0.0
    %874 = vmatprep.subr.mxu0 0.0
    %875 = vmatpush1.msra.mxu0 0.0
    %876 = vmatprep.subr.mxu0 0.0
    %877 = vmatpush1.msra.mxu0 0.0
    %878 = vmatprep.subr.mxu0 0.0
    %879 = vmatpush1.msra.mxu0 0.0
    %880 = vmatprep.subr.mxu0 0.0
    %881 = vmatpush1.msra.mxu0 0.0
    %882 = vmatprep.subr.mxu0 0.0
    %883 = vmatpush1.msra.mxu0 0.0
    %884 = vmatprep.subr.mxu0 0.0
    %885 = vmatpush1.msra.mxu0 0.0
    %886 = vmatprep.subr.mxu0 0.0
    %887 = vmatpush1.msra.mxu0 0.0
    %888 = vmatprep.subr.mxu0 0.0
    %889 = vmatpush1.msra.mxu0 0.0
    %890 = vmatprep.subr.mxu0 0.0
    %891 = vmatpush1.msra.mxu0 0.0
    %892 = vmatprep.subr.mxu0 0.0
    %893 = vmatpush1.msra.mxu0 0.0
    %894 = vmatprep.subr.mxu0 0.0
    %895 = vmatpush1.msra.mxu0 0.0
    %896 = vmatprep.subr.mxu0 0.0
    %897 = vmatpush1.msra.mxu0 0.0
    %898 = vmatprep.subr.mxu0 0.0
    %899 = vmatpush1.msra.mxu0 0.0
    %900 = vmatprep.subr.mxu0 0.0
    %901 = vmatpush1.msra.mxu0 0.0
    %902 = vmatprep.subr.mxu0 0.0
    %903 = vmatpush1.msra.mxu0 0.0
    %904 = vmatprep.subr.mxu0 0.0
    %905 = vmatpush1.msra.mxu0 0.0
    %906 = vmatprep.subr.mxu0 0.0
    %907 = vmatpush1.msra.mxu0 0.0
    %908 = vmatprep.subr.mxu0 0.0
    %909 = vmatpush1.msra.mxu0 0.0
    %910 = vmatprep.subr.mxu0 0.0
    %911 = vmatpush1.msra.mxu0 0.0
    %912 = vmatprep.subr.mxu0 0.0
    %913 = vmatpush1.msra.mxu0 0.0
    %914 = vmatprep.subr.mxu0 0.0
    %915 = vmatpush1.msra.mxu0 0.0
    %916 = vmatprep.subr.mxu0 0.0
    %917 = vmatpush1.msra.mxu0 0.0
    %918 = vmatprep.subr.mxu0 0.0
    %919 = vmatpush1.msra.mxu0 0.0
    %920 = vmatprep.subr.mxu0 0.0
    %921 = vmatpush1.msra.mxu0 0.0
    %922 = vmatprep.subr.mxu0 0.0
    %923 = vmatpush1.msra.mxu0 0.0
    %924 = vmatprep.subr.mxu0 0.0
    %925 = vmatpush1.msra.mxu0 0.0
    %926 = vmatprep.subr.mxu0 0.0
    %927 = vmatpush1.msra.mxu0 0.0
    %928 = vmatprep.mubr.f32.mxu0 0.0
    %929 = vmatmul.mubr.f32.gmra.mrb[0].mxu0 %v859
    %v930 = vpop.f32.mrb[0].mxu0
    %v931 = vadd.f32 %v856, %v930
    %v932 = vpop.f32.mrb[0].mxu0
    %933 = vmatprep.mubr.f32.mxu0 0.0
    %934 = vmatmul.mubr.f32.gmra.mrb[0].mxu0 %v862
    %v935 = vpop.f32.mrb[0].mxu0
    %v936 = vadd.f32 %v856, %v935
    %v937 = vpop.f32.mrb[0].mxu0
    %938 = vdwg.mxu0
    %vm939 = vcmask 23552
    %940 = vst.msk [vmem:[%s17] sm:$0xff] %vm939, %v931
    %941 = vst.msk [vmem:[%s17 + $0x8] sm:$0xff] %vm939, %v936
    %v942 = vld [vmem:[%s9] sm:$0x7]
    %v943 = vld [vmem:[%s10] sm:$0x1]
    %v945 = vlaneseq
    %v946 = vshrl.u32 %v945, 7
    %v947 = vsub.s32 0, %v946
    %v948 = vrot.slane %v943, %v947
    %v951 = vsel %vm939, %v931, 0
    %v954 = vsel %vm939, %v936, 0
    %vm956 = vcmask 1042432
    %v958 = vsel %vm956, %v942, 0
    %960 = vmatprep.subr.mxu0 0.0
    %961 = vmatpush1.msra.mxu0 %v958
    %962 = vmatprep.subr.mxu0 0.0
    %963 = vmatpush1.msra.mxu0 0.0
    %964 = vmatprep.subr.mxu0 0.0
    %965 = vmatpush1.msra.mxu0 0.0
    %966 = vmatprep.subr.mxu0 0.0
    %967 = vmatpush1.msra.mxu0 0.0
    %968 = vmatprep.subr.mxu0 0.0
    %969 = vmatpush1.msra.mxu0 0.0
    %970 = vmatprep.subr.mxu0 0.0
    %971 = vmatpush1.msra.mxu0 0.0
    %972 = vmatprep.subr.mxu0 0.0
    %973 = vmatpush1.msra.mxu0 0.0
    %974 = vmatprep.subr.mxu0 0.0
    %975 = vmatpush1.msra.mxu0 0.0
    %976 = vmatprep.subr.mxu0 0.0
    %977 = vmatpush1.msra.mxu0 0.0
    %978 = vmatprep.subr.mxu0 0.0
    %979 = vmatpush1.msra.mxu0 0.0
    %980 = vmatprep.subr.mxu0 0.0
    %981 = vmatpush1.msra.mxu0 0.0
    %982 = vmatprep.subr.mxu0 0.0
    %983 = vmatpush1.msra.mxu0 0.0
    %984 = vmatprep.subr.mxu0 0.0
    %985 = vmatpush1.msra.mxu0 0.0
    %986 = vmatprep.subr.mxu0 0.0
    %987 = vmatpush1.msra.mxu0 0.0
    %988 = vmatprep.subr.mxu0 0.0
    %989 = vmatpush1.msra.mxu0 0.0
    %990 = vmatprep.subr.mxu0 0.0
    %991 = vmatpush1.msra.mxu0 0.0
    %992 = vmatprep.subr.mxu0 0.0
    %993 = vmatpush1.msra.mxu0 0.0
    %994 = vmatprep.subr.mxu0 0.0
    %995 = vmatpush1.msra.mxu0 0.0
    %996 = vmatprep.subr.mxu0 0.0
    %997 = vmatpush1.msra.mxu0 0.0
    %998 = vmatprep.subr.mxu0 0.0
    %999 = vmatpush1.msra.mxu0 0.0
    %1000 = vmatprep.subr.mxu0 0.0
    %1001 = vmatpush1.msra.mxu0 0.0
    %1002 = vmatprep.subr.mxu0 0.0
    %1003 = vmatpush1.msra.mxu0 0.0
    %1004 = vmatprep.subr.mxu0 0.0
    %1005 = vmatpush1.msra.mxu0 0.0
    %1006 = vmatprep.subr.mxu0 0.0
    %1007 = vmatpush1.msra.mxu0 0.0
    %1008 = vmatprep.subr.mxu0 0.0
    %1009 = vmatpush1.msra.mxu0 0.0
    %1010 = vmatprep.subr.mxu0 0.0
    %1011 = vmatpush1.msra.mxu0 0.0
    %1012 = vmatprep.subr.mxu0 0.0
    %1013 = vmatpush1.msra.mxu0 0.0
    %1014 = vmatprep.subr.mxu0 0.0
    %1015 = vmatpush1.msra.mxu0 0.0
    %1016 = vmatprep.subr.mxu0 0.0
    %1017 = vmatpush1.msra.mxu0 0.0
    %1018 = vmatprep.subr.mxu0 0.0
    %1019 = vmatpush1.msra.mxu0 0.0
    %1020 = vmatprep.subr.mxu0 0.0
    %1021 = vmatpush1.msra.mxu0 0.0
    %1022 = vmatprep.subr.mxu0 0.0
    %1023 = vmatpush1.msra.mxu0 0.0
    %1024 = vmatprep.mubr.f32.mxu0 0.0
    %1025 = vmatmul.mubr.f32.gmra.mrb[0].mxu0 %v951
    %v1026 = vpop.f32.mrb[0].mxu0
    %v1027 = vadd.f32 %v948, %v1026
    %v1028 = vpop.f32.mrb[0].mxu0
    %1029 = vmatprep.mubr.f32.mxu0 0.0
    %1030 = vmatmul.mubr.f32.gmra.mrb[0].mxu0 %v954
    %v1031 = vpop.f32.mrb[0].mxu0
    %v1032 = vadd.f32 %v948, %v1031
    %v1033 = vpop.f32.mrb[0].mxu0
    %1034 = vdwg.mxu0
    %v1035 = vtanh.pop %v1027
    %v1036 = vtanh.pop %v1032
    %v1037 = vld [vmem:[%s11] sm:$0xff]
    %v1038 = vld [vmem:[%s11 + $0x8] sm:$0xff]
    %v1039 = vld [vmem:[%s12] sm:$0x1]
    %v1041 = vlaneseq
    %v1042 = vshrl.u32 %v1041, 7
    %v1043 = vsub.s32 0, %v1042
    %v1044 = vrot.slane %v1039, %v1043
    %v1047 = vsel %vm480, %v1035, 0
    %v1050 = vsel %vm480, %v1036, 0
    %1052 = vmatprep.subr.mxu0 0.0
    %1053 = vmatpush1.msra.mxu0 %v1037
    %1054 = vmatprep.subr.mxu0 0.0
    %1055 = vmatpush1.msra.mxu0 %v1038
    %1056 = vmatprep.subr.mxu0 0.0
    %1057 = vmatpush1.msra.mxu0 0.0
    %1058 = vmatprep.subr.mxu0 0.0
    %1059 = vmatpush1.msra.mxu0 0.0
    %1060 = vmatprep.subr.mxu0 0.0
    %1061 = vmatpush1.msra.mxu0 0.0
    %1062 = vmatprep.subr.mxu0 0.0
    %1063 = vmatpush1.msra.mxu0 0.0
    %1064 = vmatprep.subr.mxu0 0.0
    %1065 = vmatpush1.msra.mxu0 0.0
    %1066 = vmatprep.subr.mxu0 0.0
    %1067 = vmatpush1.msra.mxu0 0.0
    %1068 = vmatprep.subr.mxu0 0.0
    %1069 = vmatpush1.msra.mxu0 0.0
    %1070 = vmatprep.subr.mxu0 0.0
    %1071 = vmatpush1.msra.mxu0 0.0
    %1072 = vmatprep.subr.mxu0 0.0
    %1073 = vmatpush1.msra.mxu0 0.0
    %1074 = vmatprep.subr.mxu0 0.0
    %1075 = vmatpush1.msra.mxu0 0.0
    %1076 = vmatprep.subr.mxu0 0.0
    %1077 = vmatpush1.msra.mxu0 0.0
    %1078 = vmatprep.subr.mxu0 0.0
    %1079 = vmatpush1.msra.mxu0 0.0
    %1080 = vmatprep.subr.mxu0 0.0
    %1081 = vmatpush1.msra.mxu0 0.0
    %1082 = vmatprep.subr.mxu0 0.0
    %1083 = vmatpush1.msra.mxu0 0.0
    %1084 = vmatprep.subr.mxu0 0.0
    %1085 = vmatpush1.msra.mxu0 0.0
    %1086 = vmatprep.subr.mxu0 0.0
    %1087 = vmatpush1.msra.mxu0 0.0
    %1088 = vmatprep.subr.mxu0 0.0
    %1089 = vmatpush1.msra.mxu0 0.0
    %1090 = vmatprep.subr.mxu0 0.0
    %1091 = vmatpush1.msra.mxu0 0.0
    %1092 = vmatprep.subr.mxu0 0.0
    %1093 = vmatpush1.msra.mxu0 0.0
    %1094 = vmatprep.subr.mxu0 0.0
    %1095 = vmatpush1.msra.mxu0 0.0
    %1096 = vmatprep.subr.mxu0 0.0
    %1097 = vmatpush1.msra.mxu0 0.0
    %1098 = vmatprep.subr.mxu0 0.0
    %1099 = vmatpush1.msra.mxu0 0.0
    %1100 = vmatprep.subr.mxu0 0.0
    %1101 = vmatpush1.msra.mxu0 0.0
    %1102 = vmatprep.subr.mxu0 0.0
    %1103 = vmatpush1.msra.mxu0 0.0
    %1104 = vmatprep.subr.mxu0 0.0
    %1105 = vmatpush1.msra.mxu0 0.0
    %1106 = vmatprep.subr.mxu0 0.0
    %1107 = vmatpush1.msra.mxu0 0.0
    %1108 = vmatprep.subr.mxu0 0.0
    %1109 = vmatpush1.msra.mxu0 0.0
    %1110 = vmatprep.subr.mxu0 0.0
    %1111 = vmatpush1.msra.mxu0 0.0
    %1112 = vmatprep.subr.mxu0 0.0
    %1113 = vmatpush1.msra.mxu0 0.0
    %1114 = vmatprep.subr.mxu0 0.0
    %1115 = vmatpush1.msra.mxu0 0.0
    %1116 = vmatprep.mubr.f32.mxu0 0.0
    %1117 = vmatmul.mubr.f32.gmra.mrb[0].mxu0 %v1047
    %v1118 = vpop.f32.mrb[0].mxu0
    %v1119 = vadd.f32 %v1044, %v1118
    %v1120 = vpop.f32.mrb[0].mxu0
    %1121 = vmatprep.mubr.f32.mxu0 0.0
    %1122 = vmatmul.mubr.f32.gmra.mrb[0].mxu0 %v1050
    %v1123 = vpop.f32.mrb[0].mxu0
    %v1124 = vadd.f32 %v1044, %v1123
    %v1125 = vpop.f32.mrb[0].mxu0
    %1126 = vdwg.mxu0
    %v1127 = vtanh.pop %v1119
    %v1128 = vtanh.pop %v1124
    %v1129 = vld [vmem:[%s13] sm:$0xff]
    %v1130 = vld [vmem:[%s13 + $0x8] sm:$0xff]
    %v1131 = vld [vmem:[%s13 + $0x10] sm:$0xff]
    %v1132 = vld [vmem:[%s13 + $0x18] sm:$0xff]
    %v1133 = vld [vmem:[%s13 + $0x20] sm:$0xff]
    %v1134 = vld [vmem:[%s13 + $0x28] sm:$0xff]
    %v1135 = vld [vmem:[%s13 + $0x30] sm:$0xff]
    %v1136 = vld [vmem:[%s13 + $0x38] sm:$0xff]
    %v1137 = vld [vmem:[%s14] sm:$0x1]
    %v1139 = vlaneseq
    %v1140 = vshrl.u32 %v1139, 7
    %v1141 = vsub.s32 0, %v1140
    %v1142 = vrot.slane %v1137, %v1141
    %v1145 = vsel %vm765, %v1127, 0
    %v1148 = vsel %vm765, %v1128, 0
    %1150 = vmatprep.subr.mxu0 0.0
    %1151 = vmatpush1.msra.mxu0 %v1129
    %1152 = vmatprep.subr.mxu0 0.0
    %1153 = vmatpush1.msra.mxu0 %v1130
    %1154 = vmatprep.subr.mxu0 0.0
    %1155 = vmatpush1.msra.mxu0 %v1131
    %1156 = vmatprep.subr.mxu0 0.0
    %1157 = vmatpush1.msra.mxu0 %v1132
    %1158 = vmatprep.subr.mxu0 0.0
    %1159 = vmatpush1.msra.mxu0 %v1133
    %1160 = vmatprep.subr.mxu0 0.0
    %1161 = vmatpush1.msra.mxu0 %v1134
    %1162 = vmatprep.subr.mxu0 0.0
    %1163 = vmatpush1.msra.mxu0 %v1135
    %1164 = vmatprep.subr.mxu0 0.0
    %1165 = vmatpush1.msra.mxu0 %v1136
    %1166 = vmatprep.subr.mxu0 0.0
    %1167 = vmatpush1.msra.mxu0 0.0
    %1168 = vmatprep.subr.mxu0 0.0
    %1169 = vmatpush1.msra.mxu0 0.0
    %1170 = vmatprep.subr.mxu0 0.0
    %1171 = vmatpush1.msra.mxu0 0.0
    %1172 = vmatprep.subr.mxu0 0.0
    %1173 = vmatpush1.msra.mxu0 0.0
    %1174 = vmatprep.subr.mxu0 0.0
    %1175 = vmatpush1.msra.mxu0 0.0
    %1176 = vmatprep.subr.mxu0 0.0
    %1177 = vmatpush1.msra.mxu0 0.0
    %1178 = vmatprep.subr.mxu0 0.0
    %1179 = vmatpush1.msra.mxu0 0.0
    %1180 = vmatprep.subr.mxu0 0.0
    %1181 = vmatpush1.msra.mxu0 0.0
    %1182 = vmatprep.subr.mxu0 0.0
    %1183 = vmatpush1.msra.mxu0 0.0
    %1184 = vmatprep.subr.mxu0 0.0
    %1185 = vmatpush1.msra.mxu0 0.0
    %1186 = vmatprep.subr.mxu0 0.0
    %1187 = vmatpush1.msra.mxu0 0.0
    %1188 = vmatprep.subr.mxu0 0.0
    %1189 = vmatpush1.msra.mxu0 0.0
    %1190 = vmatprep.subr.mxu0 0.0
    %1191 = vmatpush1.msra.mxu0 0.0
    %1192 = vmatprep.subr.mxu0 0.0
    %1193 = vmatpush1.msra.mxu0 0.0
    %1194 = vmatprep.subr.mxu0 0.0
    %1195 = vmatpush1.msra.mxu0 0.0
    %1196 = vmatprep.subr.mxu0 0.0
    %1197 = vmatpush1.msra.mxu0 0.0
    %1198 = vmatprep.subr.mxu0 0.0
    %1199 = vmatpush1.msra.mxu0 0.0
    %1200 = vmatprep.subr.mxu0 0.0
    %1201 = vmatpush1.msra.mxu0 0.0
    %1202 = vmatprep.subr.mxu0 0.0
    %1203 = vmatpush1.msra.mxu0 0.0
    %1204 = vmatprep.subr.mxu0 0.0
    %1205 = vmatpush1.msra.mxu0 0.0
    %1206 = vmatprep.subr.mxu0 0.0
    %1207 = vmatpush1.msra.mxu0 0.0
    %1208 = vmatprep.subr.mxu0 0.0
    %1209 = vmatpush1.msra.mxu0 0.0
    %1210 = vmatprep.subr.mxu0 0.0
    %1211 = vmatpush1.msra.mxu0 0.0
    %1212 = vmatprep.subr.mxu0 0.0
    %1213 = vmatpush1.msra.mxu0 0.0
    %1214 = vmatprep.mubr.f32.mxu0 0.0
    %1215 = vmatmul.mubr.f32.gmra.mrb[0].mxu0 %v1145
    %v1216 = vpop.f32.mrb[0].mxu0
    %v1217 = vadd.f32 %v1142, %v1216
    %v1218 = vpop.f32.mrb[0].mxu0
    %1219 = vmatprep.mubr.f32.mxu0 0.0
    %1220 = vmatmul.mubr.f32.gmra.mrb[0].mxu0 %v1148
    %v1221 = vpop.f32.mrb[0].mxu0
    %v1222 = vadd.f32 %v1142, %v1221
    %v1223 = vpop.f32.mrb[0].mxu0
    %1224 = vdwg.mxu0
    %v1225 = vtanh.pop %v1217
    %v1226 = vtanh.pop %v1222
    %v1227 = vld [vmem:[%s15] sm:$0xff]
    %v1228 = vld [vmem:[%s15 + $0x8] sm:$0xff]
    %v1229 = vld [vmem:[%s15 + $0x10] sm:$0xff]
    %v1230 = vld [vmem:[%s15 + $0x18] sm:$0xf]
    %v1231 = vld [vmem:[%s15 + $0x1c] sm:$0xff]
    %v1232 = vld [vmem:[%s15 + $0x24] sm:$0xff]
    %v1233 = vld [vmem:[%s15 + $0x2c] sm:$0xff]
    %v1234 = vld [vmem:[%s15 + $0x34] sm:$0xf]
    %v1235 = vld [vmem:[%s15 + $0x38] sm:$0xff]
    %v1236 = vld [vmem:[%s15 + $0x40] sm:$0xff]
    %v1237 = vld [vmem:[%s15 + $0x48] sm:$0xff]
    %v1238 = vld [vmem:[%s15 + $0x50] sm:$0xf]
    %v1239 = vld [vmem:[%s15 + $0x54] sm:$0xff]
    %v1240 = vld [vmem:[%s15 + $0x5c] sm:$0xff]
    %v1241 = vld [vmem:[%s15 + $0x64] sm:$0xff]
    %v1242 = vld [vmem:[%s15 + $0x6c] sm:$0xf]
    %v1243 = vld [vmem:[%s15 + $0x70] sm:$0xff]
    %v1244 = vld [vmem:[%s15 + $0x78] sm:$0xff]
    %v1245 = vld [vmem:[%s15 + $0x80] sm:$0xff]
    %v1246 = vld [vmem:[%s15 + $0x88] sm:$0xf]
    %v1247 = vld [vmem:[%s15 + $0x8c] sm:$0xff]
    %v1248 = vld [vmem:[%s15 + $0x94] sm:$0xff]
    %v1249 = vld [vmem:[%s15 + $0x9c] sm:$0xff]
    %v1250 = vld [vmem:[%s15 + $0xa4] sm:$0xf]
    %v1251 = vld [vmem:[%s15 + $0xa8] sm:$0xff]
    %v1252 = vld [vmem:[%s15 + $0xb0] sm:$0xff]
    %v1253 = vld [vmem:[%s15 + $0xb8] sm:$0xff]
    %v1254 = vld [vmem:[%s15 + $0xc0] sm:$0xf]
    %v1255 = vld [vmem:[%s15 + $0xc4] sm:$0xff]
    %v1256 = vld [vmem:[%s15 + $0xcc] sm:$0xff]
    %v1257 = vld [vmem:[%s15 + $0xd4] sm:$0xff]
    %v1258 = vld [vmem:[%s15 + $0xdc] sm:$0xf]
    %v1259 = vld [vmem:[%s15 + $0xe0] sm:$0xff]
    %v1260 = vld [vmem:[%s15 + $0xe8] sm:$0xff]
    %v1261 = vld [vmem:[%s15 + $0xf0] sm:$0xff]
    %v1262 = vld [vmem:[%s15 + $0xf8] sm:$0xf]
    %v1263 = vld [vmem:[%s15 + $0xfc] sm:$0xff]
    %v1264 = vld [vmem:[%s15 + $0x104] sm:$0xff]
    %v1265 = vld [vmem:[%s15 + $0x10c] sm:$0xff]
    %v1266 = vld [vmem:[%s15 + $0x114] sm:$0xf]
    %v1267 = vld [vmem:[%s15 + $0x118] sm:$0xff]
    %v1268 = vld [vmem:[%s15 + $0x120] sm:$0xff]
    %v1269 = vld [vmem:[%s15 + $0x128] sm:$0xff]
    %v1270 = vld [vmem:[%s15 + $0x130] sm:$0xf]
    %v1271 = vld [vmem:[%s15 + $0x134] sm:$0xff]
    %v1272 = vld [vmem:[%s15 + $0x13c] sm:$0xff]
    %v1273 = vld [vmem:[%s15 + $0x144] sm:$0xff]
    %v1274 = vld [vmem:[%s15 + $0x14c] sm:$0xf]
    %v1275 = vld [vmem:[%s15 + $0x150] sm:$0xff]
    %v1276 = vld [vmem:[%s15 + $0x158] sm:$0xff]
    %v1277 = vld [vmem:[%s15 + $0x160] sm:$0xff]
    %v1278 = vld [vmem:[%s15 + $0x168] sm:$0xf]
    %v1279 = vld [vmem:[%s15 + $0x16c] sm:$0xff]
    %v1280 = vld [vmem:[%s15 + $0x174] sm:$0xff]
    %v1281 = vld [vmem:[%s15 + $0x17c] sm:$0xff]
    %v1282 = vld [vmem:[%s15 + $0x184] sm:$0xf]
    %v1283 = vld [vmem:[%s15 + $0x188] sm:$0xff]
    %v1284 = vld [vmem:[%s15 + $0x190] sm:$0xff]
    %v1285 = vld [vmem:[%s15 + $0x198] sm:$0xff]
    %v1286 = vld [vmem:[%s15 + $0x1a0] sm:$0xf]
    %v1287 = vld [vmem:[%s15 + $0x1a4] sm:$0xff]
    %v1288 = vld [vmem:[%s15 + $0x1ac] sm:$0xff]
    %v1289 = vld [vmem:[%s15 + $0x1b4] sm:$0xff]
    %v1290 = vld [vmem:[%s15 + $0x1bc] sm:$0xf]
    %v1291 = vld [vmem:[%s16] sm:$0x7f]
    %v1292 = vpack.c.bf16 %v1226, %v1225
    %v1294 = vlaneseq
    %v1295 = vshrl.u32 %v1294, 7
    %v1296 = vsub.s32 0, %v1295
    %v1297 = vrot.slane %v1291, %v1296
    %v1298 = vlaneseq
    %v1299 = vshrl.u32 %v1298, 7
    %v1300 = vsub.s32 1, %v1299
    %v1301 = vrot.slane %v1291, %v1300
    %v1302 = vlaneseq
    %v1303 = vshrl.u32 %v1302, 7
    %v1304 = vsub.s32 2, %v1303
    %v1305 = vrot.slane %v1291, %v1304
    %v1306 = vlaneseq
    %v1307 = vshrl.u32 %v1306, 7
    %v1308 = vsub.s32 3, %v1307
    %v1309 = vrot.slane %v1291, %v1308
    %v1310 = vlaneseq
    %v1311 = vshrl.u32 %v1310, 7
    %v1312 = vsub.s32 4, %v1311
    %v1313 = vrot.slane %v1291, %v1312
    %v1314 = vlaneseq
    %v1315 = vshrl.u32 %v1314, 7
    %v1316 = vsub.s32 5, %v1315
    %v1317 = vrot.slane %v1291, %v1316
    %v1318 = vlaneseq
    %v1319 = vshrl.u32 %v1318, 7
    %v1320 = vsub.s32 6, %v1319
    %v1321 = vrot.slane %v1291, %v1320
    %v1393 = vunpack.c.l.b16 %v1227
    %v1394 = vunpack.c.h.b16 %v1227
    %v1395 = vunpack.c.l.b16 %v1228
    %v1396 = vunpack.c.h.b16 %v1228
    %v1397 = vunpack.c.l.b16 %v1229
    %v1398 = vunpack.c.h.b16 %v1229
    %v1399 = vunpack.c.l.b16 %v1230
    %v1400 = vunpack.c.l.b16 %v1231
    %v1401 = vunpack.c.h.b16 %v1231
    %v1402 = vunpack.c.l.b16 %v1232
    %v1403 = vunpack.c.h.b16 %v1232
    %v1404 = vunpack.c.l.b16 %v1233
    %v1405 = vunpack.c.h.b16 %v1233
    %v1406 = vunpack.c.l.b16 %v1234
    %v1407 = vunpack.c.l.b16 %v1235
    %v1408 = vunpack.c.h.b16 %v1235
    %v1409 = vunpack.c.l.b16 %v1236
    %v1410 = vunpack.c.h.b16 %v1236
    %v1411 = vunpack.c.l.b16 %v1237
    %v1412 = vunpack.c.h.b16 %v1237
    %v1413 = vunpack.c.l.b16 %v1238
    %v1414 = vunpack.c.l.b16 %v1239
    %v1415 = vunpack.c.h.b16 %v1239
    %v1416 = vunpack.c.l.b16 %v1240
    %v1417 = vunpack.c.h.b16 %v1240
    %v1418 = vunpack.c.l.b16 %v1241
    %v1419 = vunpack.c.h.b16 %v1241
    %v1420 = vunpack.c.l.b16 %v1242
    %v1421 = vunpack.c.l.b16 %v1243
    %v1422 = vunpack.c.h.b16 %v1243
    %v1423 = vunpack.c.l.b16 %v1244
    %v1424 = vunpack.c.h.b16 %v1244
    %v1425 = vunpack.c.l.b16 %v1245
    %v1426 = vunpack.c.h.b16 %v1245
    %v1427 = vunpack.c.l.b16 %v1246
    %v1428 = vunpack.c.l.b16 %v1247
    %v1429 = vunpack.c.h.b16 %v1247
    %v1430 = vunpack.c.l.b16 %v1248
    %v1431 = vunpack.c.h.b16 %v1248
    %v1432 = vunpack.c.l.b16 %v1249
    %v1433 = vunpack.c.h.b16 %v1249
    %v1434 = vunpack.c.l.b16 %v1250
    %v1435 = vunpack.c.l.b16 %v1251
    %v1436 = vunpack.c.h.b16 %v1251
    %v1437 = vunpack.c.l.b16 %v1252
    %v1438 = vunpack.c.h.b16 %v1252
    %v1439 = vunpack.c.l.b16 %v1253
    %v1440 = vunpack.c.h.b16 %v1253
    %v1441 = vunpack.c.l.b16 %v1254
    %v1442 = vunpack.c.l.b16 %v1255
    %v1443 = vunpack.c.h.b16 %v1255
    %v1444 = vunpack.c.l.b16 %v1256
    %v1445 = vunpack.c.h.b16 %v1256
    %v1446 = vunpack.c.l.b16 %v1257
    %v1447 = vunpack.c.h.b16 %v1257
    %v1448 = vunpack.c.l.b16 %v1258
    %v1449 = vunpack.c.l.b16 %v1259
    %v1450 = vunpack.c.h.b16 %v1259
    %v1451 = vunpack.c.l.b16 %v1260
    %v1452 = vunpack.c.h.b16 %v1260
    %v1453 = vunpack.c.l.b16 %v1261
    %v1454 = vunpack.c.h.b16 %v1261
    %v1455 = vunpack.c.l.b16 %v1262
    %v1456 = vunpack.c.l.b16 %v1263
    %v1457 = vunpack.c.h.b16 %v1263
    %v1458 = vunpack.c.l.b16 %v1264
    %v1459 = vunpack.c.h.b16 %v1264
    %v1460 = vunpack.c.l.b16 %v1265
    %v1461 = vunpack.c.h.b16 %v1265
    %v1462 = vunpack.c.l.b16 %v1266
    %v1463 = vunpack.c.l.b16 %v1267
    %v1464 = vunpack.c.h.b16 %v1267
    %v1465 = vunpack.c.l.b16 %v1268
    %v1466 = vunpack.c.h.b16 %v1268
    %v1467 = vunpack.c.l.b16 %v1269
    %v1468 = vunpack.c.h.b16 %v1269
    %v1469 = vunpack.c.l.b16 %v1270
    %v1470 = vunpack.c.l.b16 %v1271
    %v1471 = vunpack.c.h.b16 %v1271
    %v1472 = vunpack.c.l.b16 %v1272
    %v1473 = vunpack.c.h.b16 %v1272
    %v1474 = vunpack.c.l.b16 %v1273
    %v1475 = vunpack.c.h.b16 %v1273
    %v1476 = vunpack.c.l.b16 %v1274
    %v1477 = vunpack.c.l.b16 %v1275
    %v1478 = vunpack.c.h.b16 %v1275
    %v1479 = vunpack.c.l.b16 %v1276
    %v1480 = vunpack.c.h.b16 %v1276
    %v1481 = vunpack.c.l.b16 %v1277
    %v1482 = vunpack.c.h.b16 %v1277
    %v1483 = vunpack.c.l.b16 %v1278
    %v1484 = vunpack.c.l.b16 %v1279
    %v1485 = vunpack.c.h.b16 %v1279
    %v1486 = vunpack.c.l.b16 %v1280
    %v1487 = vunpack.c.h.b16 %v1280
    %v1488 = vunpack.c.l.b16 %v1281
    %v1489 = vunpack.c.h.b16 %v1281
    %v1490 = vunpack.c.l.b16 %v1282
    %v1491 = vunpack.c.l.b16 %v1283
    %v1492 = vunpack.c.h.b16 %v1283
    %v1493 = vunpack.c.l.b16 %v1284
    %v1494 = vunpack.c.h.b16 %v1284
    %v1495 = vunpack.c.l.b16 %v1285
    %v1496 = vunpack.c.h.b16 %v1285
    %v1497 = vunpack.c.l.b16 %v1286
    %v1498 = vunpack.c.l.b16 %v1287
    %v1499 = vunpack.c.h.b16 %v1287
    %v1500 = vunpack.c.l.b16 %v1288
    %v1501 = vunpack.c.h.b16 %v1288
    %v1502 = vunpack.c.l.b16 %v1289
    %v1503 = vunpack.c.h.b16 %v1289
    %v1504 = vunpack.c.l.b16 %v1290
    %v1505 = vpack.c.b16 %v1400, %v1393
    %v1506 = vpack.c.b16 %v1401, %v1394
    %v1507 = vpack.c.b16 %v1402, %v1395
    %v1508 = vpack.c.b16 %v1403, %v1396
    %v1509 = vpack.c.b16 %v1404, %v1397
    %v1510 = vpack.c.b16 %v1405, %v1398
    %v1511 = vpack.c.b16 %v1406, %v1399
    %v1512 = vpack.c.b16 %v1414, %v1407
    %v1513 = vpack.c.b16 %v1415, %v1408
    %v1514 = vpack.c.b16 %v1416, %v1409
    %v1515 = vpack.c.b16 %v1417, %v1410
    %v1516 = vpack.c.b16 %v1418, %v1411
    %v1517 = vpack.c.b16 %v1419, %v1412
    %v1518 = vpack.c.b16 %v1420, %v1413
    %v1519 = vpack.c.b16 %v1428, %v1421
    %v1520 = vpack.c.b16 %v1429, %v1422
    %v1521 = vpack.c.b16 %v1430, %v1423
    %v1522 = vpack.c.b16 %v1431, %v1424
    %v1523 = vpack.c.b16 %v1432, %v1425
    %v1524 = vpack.c.b16 %v1433, %v1426
    %v1525 = vpack.c.b16 %v1434, %v1427
    %v1526 = vpack.c.b16 %v1442, %v1435
    %v1527 = vpack.c.b16 %v1443, %v1436
    %v1528 = vpack.c.b16 %v1444, %v1437
    %v1529 = vpack.c.b16 %v1445, %v1438
    %v1530 = vpack.c.b16 %v1446, %v1439
    %v1531 = vpack.c.b16 %v1447, %v1440
    %v1532 = vpack.c.b16 %v1448, %v1441
    %v1533 = vpack.c.b16 %v1456, %v1449
    %v1534 = vpack.c.b16 %v1457, %v1450
    %v1535 = vpack.c.b16 %v1458, %v1451
    %v1536 = vpack.c.b16 %v1459, %v1452
    %v1537 = vpack.c.b16 %v1460, %v1453
    %v1538 = vpack.c.b16 %v1461, %v1454
    %v1539 = vpack.c.b16 %v1462, %v1455
    %v1540 = vpack.c.b16 %v1470, %v1463
    %v1541 = vpack.c.b16 %v1471, %v1464
    %v1542 = vpack.c.b16 %v1472, %v1465
    %v1543 = vpack.c.b16 %v1473, %v1466
    %v1544 = vpack.c.b16 %v1474, %v1467
    %v1545 = vpack.c.b16 %v1475, %v1468
    %v1546 = vpack.c.b16 %v1476, %v1469
    %v1547 = vpack.c.b16 %v1484, %v1477
    %v1548 = vpack.c.b16 %v1485, %v1478
    %v1549 = vpack.c.b16 %v1486, %v1479
    %v1550 = vpack.c.b16 %v1487, %v1480
    %v1551 = vpack.c.b16 %v1488, %v1481
    %v1552 = vpack.c.b16 %v1489, %v1482
    %v1553 = vpack.c.b16 %v1490, %v1483
    %v1554 = vpack.c.b16 %v1498, %v1491
    %v1555 = vpack.c.b16 %v1499, %v1492
    %v1556 = vpack.c.b16 %v1500, %v1493
    %v1557 = vpack.c.b16 %v1501, %v1494
    %v1558 = vpack.c.b16 %v1502, %v1495
    %v1559 = vpack.c.b16 %v1503, %v1496
    %v1560 = vpack.c.b16 %v1504, %v1497
    %1617 = vmatprep.subr.bf16.mxu0 %v1506
    %1618 = vmatpush1.bf16.msra.mxu0 %v1505
    %1619 = vmatprep.subr.bf16.mxu0 %v1513
    %1620 = vmatpush1.bf16.msra.mxu0 %v1512
    %1621 = vmatprep.subr.bf16.mxu0 %v1520
    %1622 = vmatpush1.bf16.msra.mxu0 %v1519
    %1623 = vmatprep.subr.bf16.mxu0 %v1527
    %1624 = vmatpush1.bf16.msra.mxu0 %v1526
    %1625 = vmatprep.subr.bf16.mxu0 %v1534
    %1626 = vmatpush1.bf16.msra.mxu0 %v1533
    %1627 = vmatprep.subr.bf16.mxu0 %v1541
    %1628 = vmatpush1.bf16.msra.mxu0 %v1540
    %1629 = vmatprep.subr.bf16.mxu0 %v1548
    %1630 = vmatpush1.bf16.msra.mxu0 %v1547
    %1631 = vmatprep.subr.bf16.mxu0 %v1555
    %1632 = vmatpush1.bf16.msra.mxu0 %v1554
    %1633 = vmatprep.subr.bf16.mxu0 0
    %1634 = vmatpush1.bf16.msra.mxu0 0
    %1635 = vmatprep.subr.bf16.mxu0 0
    %1636 = vmatpush1.bf16.msra.mxu0 0
    %1637 = vmatprep.subr.bf16.mxu0 0
    %1638 = vmatpush1.bf16.msra.mxu0 0
    %1639 = vmatprep.subr.bf16.mxu0 0
    %1640 = vmatpush1.bf16.msra.mxu0 0
    %1641 = vmatprep.subr.bf16.mxu0 0
    %1642 = vmatpush1.bf16.msra.mxu0 0
    %1643 = vmatprep.subr.bf16.mxu0 0
    %1644 = vmatpush1.bf16.msra.mxu0 0
    %1645 = vmatprep.subr.bf16.mxu0 0
    %1646 = vmatpush1.bf16.msra.mxu0 0
    %1647 = vmatprep.subr.bf16.mxu0 0
    %1648 = vmatpush1.bf16.msra.mxu0 0
    %1649 = vmatprep.mubr.bf16.mxu0 0
    %1650 = vmatmul.mubr.bf16.gmra.mrb[0].mxu0 %v1292
    %v1651 = vpop.f32.mrb[0].mxu0
    %v1652 = vadd.f32 %v1297, %v1651
    %v1653 = vpop.f32.mrb[0].mxu0
    %v1654 = vadd.f32 %v1301, %v1653
    %v1655 = vpop.f32.mrb[0].mxu0
    %v1656 = vadd.f32 %v1297, %v1655
    %v1657 = vpop.f32.mrb[0].mxu0
    %v1658 = vadd.f32 %v1301, %v1657
    %1659 = vdwg.mxu0
    %1660 = vmatprep.subr.bf16.mxu0 %v1508
    %1661 = vmatpush1.bf16.msra.mxu0 %v1507
    %1662 = vmatprep.subr.bf16.mxu0 %v1515
    %1663 = vmatpush1.bf16.msra.mxu0 %v1514
    %1664 = vmatprep.subr.bf16.mxu0 %v1522
    %1665 = vmatpush1.bf16.msra.mxu0 %v1521
    %1666 = vmatprep.subr.bf16.mxu0 %v1529
    %1667 = vmatpush1.bf16.msra.mxu0 %v1528
    %1668 = vmatprep.subr.bf16.mxu0 %v1536
    %1669 = vmatpush1.bf16.msra.mxu0 %v1535
    %1670 = vmatprep.subr.bf16.mxu0 %v1543
    %1671 = vmatpush1.bf16.msra.mxu0 %v1542
    %1672 = vmatprep.subr.bf16.mxu0 %v1550
    %1673 = vmatpush1.bf16.msra.mxu0 %v1549
    %1674 = vmatprep.subr.bf16.mxu0 %v1557
    %1675 = vmatpush1.bf16.msra.mxu0 %v1556
    %1676 = vmatprep.subr.bf16.mxu0 0
    %1677 = vmatpush1.bf16.msra.mxu0 0
    %1678 = vmatprep.subr.bf16.mxu0 0
    %1679 = vmatpush1.bf16.msra.mxu0 0
    %1680 = vmatprep.subr.bf16.mxu0 0
    %1681 = vmatpush1.bf16.msra.mxu0 0
    %1682 = vmatprep.subr.bf16.mxu0 0
    %1683 = vmatpush1.bf16.msra.mxu0 0
    %1684 = vmatprep.subr.bf16.mxu0 0
    %1685 = vmatpush1.bf16.msra.mxu0 0
    %1686 = vmatprep.subr.bf16.mxu0 0
    %1687 = vmatpush1.bf16.msra.mxu0 0
    %1688 = vmatprep.subr.bf16.mxu0 0
    %1689 = vmatpush1.bf16.msra.mxu0 0
    %1690 = vmatprep.subr.bf16.mxu0 0
    %1691 = vmatpush1.bf16.msra.mxu0 0
    %1692 = vmatprep.mubr.bf16.mxu0 0
    %1693 = vmatmul.mubr.bf16.gmra.mrb[0].mxu0 %v1292
    %v1694 = vpop.f32.mrb[0].mxu0
    %v1695 = vadd.f32 %v1305, %v1694
    %v1696 = vpop.f32.mrb[0].mxu0
    %v1697 = vadd.f32 %v1309, %v1696
    %v1698 = vpop.f32.mrb[0].mxu0
    %v1699 = vadd.f32 %v1305, %v1698
    %v1700 = vpop.f32.mrb[0].mxu0
    %v1701 = vadd.f32 %v1309, %v1700
    %1702 = vdwg.mxu0
    %1703 = vmatprep.subr.bf16.mxu0 %v1510
    %1704 = vmatpush1.bf16.msra.mxu0 %v1509
    %1705 = vmatprep.subr.bf16.mxu0 %v1517
    %1706 = vmatpush1.bf16.msra.mxu0 %v1516
    %1707 = vmatprep.subr.bf16.mxu0 %v1524
    %1708 = vmatpush1.bf16.msra.mxu0 %v1523
    %1709 = vmatprep.subr.bf16.mxu0 %v1531
    %1710 = vmatpush1.bf16.msra.mxu0 %v1530
    %1711 = vmatprep.subr.bf16.mxu0 %v1538
    %1712 = vmatpush1.bf16.msra.mxu0 %v1537
    %1713 = vmatprep.subr.bf16.mxu0 %v1545
    %1714 = vmatpush1.bf16.msra.mxu0 %v1544
    %1715 = vmatprep.subr.bf16.mxu0 %v1552
    %1716 = vmatpush1.bf16.msra.mxu0 %v1551
    %1717 = vmatprep.subr.bf16.mxu0 %v1559
    %1718 = vmatpush1.bf16.msra.mxu0 %v1558
    %1719 = vmatprep.subr.bf16.mxu0 0
    %1720 = vmatpush1.bf16.msra.mxu0 0
    %1721 = vmatprep.subr.bf16.mxu0 0
    %1722 = vmatpush1.bf16.msra.mxu0 0
    %1723 = vmatprep.subr.bf16.mxu0 0
    %1724 = vmatpush1.bf16.msra.mxu0 0
    %1725 = vmatprep.subr.bf16.mxu0 0
    %1726 = vmatpush1.bf16.msra.mxu0 0
    %1727 = vmatprep.subr.bf16.mxu0 0
    %1728 = vmatpush1.bf16.msra.mxu0 0
    %1729 = vmatprep.subr.bf16.mxu0 0
    %1730 = vmatpush1.bf16.msra.mxu0 0
    %1731 = vmatprep.subr.bf16.mxu0 0
    %1732 = vmatpush1.bf16.msra.mxu0 0
    %1733 = vmatprep.subr.bf16.mxu0 0
    %1734 = vmatpush1.bf16.msra.mxu0 0
    %1735 = vmatprep.mubr.bf16.mxu0 0
    %1736 = vmatmul.mubr.bf16.gmra.mrb[0].mxu0 %v1292
    %v1737 = vpop.f32.mrb[0].mxu0
    %v1738 = vadd.f32 %v1313, %v1737
    %v1739 = vpop.f32.mrb[0].mxu0
    %v1740 = vadd.f32 %v1317, %v1739
    %v1741 = vpop.f32.mrb[0].mxu0
    %v1742 = vadd.f32 %v1313, %v1741
    %v1743 = vpop.f32.mrb[0].mxu0
    %v1744 = vadd.f32 %v1317, %v1743
    %1745 = vdwg.mxu0
    %1746 = vmatprep.subr.bf16.mxu0 0
    %1747 = vmatpush1.bf16.msra.mxu0 %v1511
    %1748 = vmatprep.subr.bf16.mxu0 0
    %1749 = vmatpush1.bf16.msra.mxu0 %v1518
    %1750 = vmatprep.subr.bf16.mxu0 0
    %1751 = vmatpush1.bf16.msra.mxu0 %v1525
    %1752 = vmatprep.subr.bf16.mxu0 0
    %1753 = vmatpush1.bf16.msra.mxu0 %v1532
    %1754 = vmatprep.subr.bf16.mxu0 0
    %1755 = vmatpush1.bf16.msra.mxu0 %v1539
    %1756 = vmatprep.subr.bf16.mxu0 0
    %1757 = vmatpush1.bf16.msra.mxu0 %v1546
    %1758 = vmatprep.subr.bf16.mxu0 0
    %1759 = vmatpush1.bf16.msra.mxu0 %v1553
    %1760 = vmatprep.subr.bf16.mxu0 0
    %1761 = vmatpush1.bf16.msra.mxu0 %v1560
    %1762 = vmatprep.subr.bf16.mxu0 0
    %1763 = vmatpush1.bf16.msra.mxu0 0
    %1764 = vmatprep.subr.bf16.mxu0 0
    %1765 = vmatpush1.bf16.msra.mxu0 0
    %1766 = vmatprep.subr.bf16.mxu0 0
    %1767 = vmatpush1.bf16.msra.mxu0 0
    %1768 = vmatprep.subr.bf16.mxu0 0
    %1769 = vmatpush1.bf16.msra.mxu0 0
    %1770 = vmatprep.subr.bf16.mxu0 0
    %1771 = vmatpush1.bf16.msra.mxu0 0
    %1772 = vmatprep.subr.bf16.mxu0 0
    %1773 = vmatpush1.bf16.msra.mxu0 0
    %1774 = vmatprep.subr.bf16.mxu0 0
    %1775 = vmatpush1.bf16.msra.mxu0 0
    %1776 = vmatprep.subr.bf16.mxu0 0
    %1777 = vmatpush1.bf16.msra.mxu0 0
    %1778 = vmatprep.mubr.bf16.mxu0 0
    %1779 = vmatmul.mubr.bf16.gmra.mrb[0].mxu0 %v1292
    %v1780 = vpop.f32.mrb[0].mxu0
    %v1781 = vadd.f32 %v1321, %v1780
    %v1782 = vpop.f32.mrb[0].mxu0
    %v1783 = vpop.f32.mrb[0].mxu0
    %v1784 = vadd.f32 %v1321, %v1783
    %v1785 = vpop.f32.mrb[0].mxu0
    %1786 = vdwg.mxu0
    %v1787 = vmul.f32 %v1652, 0.5
    %v1788 = vmul.f32 %v1654, 0.5
    %v1789 = vmul.f32 %v1695, 0.5
    %v1790 = vmul.f32 %v1697, 0.5
    %v1791 = vmul.f32 %v1738, 0.5
    %v1792 = vmul.f32 %v1740, 0.5
    %v1793 = vmul.f32 %v1781, 0.5
    %v1794 = vmul.f32 %v1656, 0.5
    %v1795 = vmul.f32 %v1658, 0.5
    %v1796 = vmul.f32 %v1699, 0.5
    %v1797 = vmul.f32 %v1701, 0.5
    %v1798 = vmul.f32 %v1742, 0.5
    %v1799 = vmul.f32 %v1744, 0.5
    %v1800 = vmul.f32 %v1784, 0.5
    %v1801 = vtanh.pop %v1787
    %v1802 = vtanh.pop %v1788
    %v1803 = vtanh.pop %v1789
    %v1804 = vtanh.pop %v1790
    %v1805 = vtanh.pop %v1791
    %v1806 = vtanh.pop %v1792
    %v1807 = vtanh.pop %v1793
    %v1808 = vtanh.pop %v1794
    %v1809 = vtanh.pop %v1795
    %v1810 = vtanh.pop %v1796
    %v1811 = vtanh.pop %v1797
    %v1812 = vtanh.pop %v1798
    %v1813 = vtanh.pop %v1799
    %v1814 = vtanh.pop %v1800
    %v1815 = vadd.f32 %v1801, 1.0
    %v1816 = vadd.f32 %v1802, 1.0
    %v1817 = vadd.f32 %v1803, 1.0
    %v1818 = vadd.f32 %v1804, 1.0
    %v1819 = vadd.f32 %v1805, 1.0
    %v1820 = vadd.f32 %v1806, 1.0
    %v1821 = vadd.f32 %v1807, 1.0
    %v1822 = vadd.f32 %v1808, 1.0
    %v1823 = vadd.f32 %v1809, 1.0
    %v1824 = vadd.f32 %v1810, 1.0
    %v1825 = vadd.f32 %v1811, 1.0
    %v1826 = vadd.f32 %v1812, 1.0
    %v1827 = vadd.f32 %v1813, 1.0
    %v1828 = vadd.f32 %v1814, 1.0
    %v1829 = vmul.f32 %v1815, 0.5
    %v1830 = vmul.f32 %v1816, 0.5
    %v1831 = vmul.f32 %v1817, 0.5
    %v1832 = vmul.f32 %v1818, 0.5
    %v1833 = vmul.f32 %v1819, 0.5
    %v1834 = vmul.f32 %v1820, 0.5
    %v1835 = vmul.f32 %v1821, 0.5
    %v1836 = vmul.f32 %v1822, 0.5
    %v1837 = vmul.f32 %v1823, 0.5
    %v1838 = vmul.f32 %v1824, 0.5
    %v1839 = vmul.f32 %v1825, 0.5
    %v1840 = vmul.f32 %v1826, 0.5
    %v1841 = vmul.f32 %v1827, 0.5
    %v1842 = vmul.f32 %v1828, 0.5
    %1843 = vst [vmem:[#allocation2] sm:$0xff] %v1829
    %1844 = vst [vmem:[#allocation2 + $0x8] sm:$0xff] %v1830
    %1845 = vst [vmem:[#allocation2 + $0x10] sm:$0xff] %v1831
    %1846 = vst [vmem:[#allocation2 + $0x18] sm:$0xff] %v1832
    %1847 = vst [vmem:[#allocation2 + $0x20] sm:$0xff] %v1833
    %1848 = vst [vmem:[#allocation2 + $0x28] sm:$0xff] %v1834
    %1849 = vst.msk [vmem:[#allocation2 + $0x30] sm:$0xff] %vm480, %v1835
    %1850 = vst [vmem:[#allocation2 + $0x38] sm:$0xff] %v1836
    %1851 = vst [vmem:[#allocation2 + $0x40] sm:$0xff] %v1837
    %1852 = vst [vmem:[#allocation2 + $0x48] sm:$0xff] %v1838
    %1853 = vst [vmem:[#allocation2 + $0x50] sm:$0xff] %v1839
    %1854 = vst [vmem:[#allocation2 + $0x58] sm:$0xff] %v1840
    %1855 = vst [vmem:[#allocation2 + $0x60] sm:$0xff] %v1841
    %1856 = vst.msk [vmem:[#allocation2 + $0x68] sm:$0xff] %vm480, %v1842
    // Predicated region
    $region70: #{autoencoder_forward.1} parent=1 // pred_check
      _
    $region71: #{autoencoder_forward.1} parent=1 // pred_check_branch
      %1858 = sbr.rel (0) target = $region73
    $region72: #{autoencoder_forward.1} parent=1 // pred_region
      _
    $region73: #{autoencoder_forward.1} parent=1 // pred_fallthru
      _
    // Predicated region
    $region74: #{autoencoder_forward.1} parent=1 // pred_check
      _
    $region75: #{autoencoder_forward.1} parent=1 // pred_check_branch
      %1860 = sbr.rel (0) target = $region77
    $region76: #{autoencoder_forward.1} parent=1 // pred_region
      %s1862 = ssub.s32 1792, 1792
      %1863 = vsyncadd [#allocation3], %s1862
      %s1864 = sshll.u32 [#allocation2], 4
      %s1865 = int_to_ptr.vmem [resolvable:$true] %s1864
      %1870 = dma.vmem_to_hbm [thread:$0]  %s1865, 1792, %s18, [#allocation3], 896, 896, 56
    $region77: #{autoencoder_forward.1} parent=1 // pred_fallthru
      _
    // Predicated region
    $region78: #{autoencoder_forward.1} parent=1 // pred_check
      _
    $region79: #{autoencoder_forward.1} parent=1 // pred_check_branch
      %1872 = sbr.rel (0) target = $region81
    $region80: #{autoencoder_forward.1} parent=1 // pred_region
      _
    $region81: #{autoencoder_forward.1} parent=1 // pred_fallthru
      _
    // Predicated region
    $region82: #{autoencoder_forward.1} parent=1 // pred_check
      _
    $region83: #{autoencoder_forward.1} parent=1 // pred_check_branch
      %1874 = sbr.rel (0) target = $region85
    $region84: #{autoencoder_forward.1} parent=1 // pred_region
      %1875 = dma.done [#allocation3], 1792
    $region85: #{autoencoder_forward.1} parent=1 // pred_fallthru
      _
    %1876 = vsyncpa [#allocation3], 1

</llo_original>
